<compile_context>
chip_gen: v7x
topology: tpu7x:2x2x1
jax: 0.10.0
libtpu: 0.0.40
codegen_flags: <defaults>
</compile_context>

<pallas_src>
import jax
import jax.numpy as jnp
from jax.experimental import pallas as pl
from jax.experimental.pallas import tpu as pltpu

INSIDE_DIMS = (64, 8)
H1, H2 = INSIDE_DIMS
LANE = 128


def _round8(n):
    return ((n + 7) // 8) * 8


def _pad_block(a):
    """Zero-pad a 2-D f32 array to (round8(rows), LANE)."""
    a = jnp.asarray(a, jnp.float32)
    assert a.ndim == 2 and a.shape[1] <= LANE, a.shape
    out = jnp.zeros((_round8(a.shape[0]), LANE), jnp.float32)
    return out.at[:a.shape[0], :a.shape[1]].set(a)


# ---------------------------------------------------------------------------
# Packing: build static per-layer metadata + the single weight slab
# ---------------------------------------------------------------------------
def pack_model(params, x, n_conv, n_fc):
    """Layout conventions (as the PyTorch module sees them):
         conv param i : (B, c_in_i+1, c_out_i, k_i)
         fc   param i : (B, n_rows_i, dims[i]+1)
    """
    conv_x = x[:n_conv]
    fc_x = x[len(x) - n_fc:]
    B = (conv_x[0] if n_conv else fc_x[0]).shape[0]

    layers = []
    w_blocks = []
    state = {"w_off": 0, "x_off": 0}

    def add_w(block):
        off = state["w_off"]
        b = _pad_block(block)
        w_blocks.append(b)
        state["w_off"] += b.shape[0]
        return off

    def add_chain(chain, xs, layer_params, lat_base, x_index0):
        prev_C = None
        for i, (p, (w1, b1, w2, b2)) in enumerate(zip(xs, layer_params)):
            if chain == "conv":
                _, cin1, cout, k = p.shape
                C, F = cout, cin1 * k
            else:
                _, C, F = p.shape
            P = 0 if i == 0 else prev_C * H2
            assert w1.shape == (F + P, H1), (chain, i, w1.shape, F, P)
            m = dict(chain=chain, is_conv=(chain == "conv"),
                     x_index=x_index0 + i, C=C, F=F, P=P,
                     x_off=state["x_off"],
                     w1x_off=add_w(w1[:F]),                       # param rows of W1
                     w1p_off=(add_w(w1[F:]) if P else -1),        # prev-rep rows of W1
                     b1_off=add_w(b1.reshape(1, H1)),
                     w2_off=add_w(w2),
                     b2_off=add_w(b2.reshape(1, H2)),
                     lat_off=(lat_base + i) * H2,
                     need_flat=(i + 1 < len(layer_params)))
            state["x_off"] += _round8(B * C)
            layers.append(m)
            prev_C = C

    # latent = cat((fc_latent, conv_latent), -1): fc reps occupy latent columns
    # [0, 8*n_fc), conv reps occupy [8*n_fc, 8*(n_fc+n_conv)).
    add_chain("conv", conv_x, params["conv_layers"], lat_base=n_fc, x_index0=0)
    add_chain("fc", fc_x, params["fc_layers"], lat_base=0, x_index0=len(x) - n_fc)

    rho_w, rho_b = params["rho"]
    n_lat = H2 * (n_conv + n_fc)
    n_classes = rho_w.shape[1]
    assert rho_w.shape[0] == n_lat
    rho_w_off = add_w(rho_w)
    rho_b_off = add_w(rho_b.reshape(1, n_classes))

    meta = dict(B=B, n_lat=n_lat, n_classes=n_classes,
                layers=tuple(layers), rho_w_off=rho_w_off, rho_b_off=rho_b_off)
    w_slab = jnp.concatenate(w_blocks, axis=0)
    return w_slab, meta


# ---------------------------------------------------------------------------
# Fused kernel
# ---------------------------------------------------------------------------
def make_kernel(meta):
    B = meta["B"]
    layers = meta["layers"]

    def kernel(x_ref, w_ref, out_ref, lat_ref):
        # TODO(synk): nn.Dropout training-mode stochastic masking not
        # implemented (this matches PyTorch eval() semantics).
        prev = {}  # per-chain flattened previous-layer rep, shape (B, C_prev*H2)
        for m in layers:
            C, F, P = m["C"], m["F"], m["P"]
            x = x_ref[m["x_off"]:m["x_off"] + B * C, :F]                   # (B*C, F)
            w1x = w_ref[m["w1x_off"]:m["w1x_off"] + F, :H1]                # (F, H1)
            b1 = w_ref[m["b1_off"]:m["b1_off"] + 1, :H1]                   # (1, H1)
            h1 = jnp.dot(x, w1x, preferred_element_type=jnp.float32) + b1
            if P:
                w1p = w_ref[m["w1p_off"]:m["w1p_off"] + P, :H1]            # (P, H1)
                contrib = jnp.dot(prev[m["chain"]], w1p,
                                  preferred_element_type=jnp.float32)      # (B, H1)
                contrib_rows = jnp.concatenate(
                    [jnp.broadcast_to(contrib[b:b + 1, :], (C, H1))
                     for b in range(B)], axis=0)                           # (B*C, H1)
                h1 = h1 + contrib_rows
            h1 = jnp.maximum(h1, 0.0)
            w2 = w_ref[m["w2_off"]:m["w2_off"] + H1, :H2]                  # (H1, H2)
            b2 = w_ref[m["b2_off"]:m["b2_off"] + 1, :H2]                   # (1, H2)
            h2 = jnp.maximum(
                jnp.dot(h1, w2, preferred_element_type=jnp.float32) + b2,
                0.0)                                                       # (B*C, H2)

            reps, flats = [], []
            for b in range(B):
                blk = h2[b * C:(b + 1) * C, :]                             # (C, H2)
                reps.append(jnp.sum(blk, axis=0, keepdims=True))           # (1, H2)
                if m["need_flat"]:
                    flats.append(jnp.concatenate(
                        [blk[c:c + 1, :] for c in range(C)], axis=-1))     # (1, C*H2)
            lat_ref[:, m["lat_off"]:m["lat_off"] + H2] = jnp.concatenate(reps, axis=0)
            if m["need_flat"]:
                prev[m["chain"]] = jnp.concatenate(flats, axis=0)          # (B, C*H2)

        rho_w = w_ref[meta["rho_w_off"]:meta["rho_w_off"] + meta["n_lat"],
                      :meta["n_classes"]]
        rho_b = w_ref[meta["rho_b_off"]:meta["rho_b_off"] + 1, :meta["n_classes"]]
        out_ref[...] = jnp.dot(lat_ref[...], rho_w,
                               preferred_element_type=jnp.float32) + rho_b

    return kernel


# ---------------------------------------------------------------------------
# Forward wrapper: pack the x slab (layout plumbing) + one pallas_call
# ---------------------------------------------------------------------------
def make_forward(meta):
    B = meta["B"]
    layers = meta["layers"]
    kernel = make_kernel(meta)
    vmem = pl.BlockSpec(memory_space=pltpu.MemorySpace.VMEM)

    def forward(w_slab, x):
        blocks = []
        for m in layers:
            p = x[m["x_index"]]
            if m["is_conv"]:
                Bp, cin1, cout, k = p.shape
                p2 = jnp.transpose(p, (0, 2, 1, 3)).reshape(Bp * cout, cin1 * k)
            else:
                Bp, nr, d = p.shape
                p2 = p.reshape(Bp * nr, d)
            blocks.append(_pad_block(p2))
        x_slab = jnp.concatenate(blocks, axis=0)

        return pl.pallas_call(
            kernel,
            out_shape=jax.ShapeDtypeStruct((B, meta["n_classes"]), jnp.float32),
            in_specs=[vmem, vmem],
            out_specs=vmem,
            scratch_shapes=[pltpu.VMEM((B, meta["n_lat"]), jnp.float32)],
        )(x_slab, w_slab)

    return forward


# ---------------------------------------------------------------------------
# Pure-JAX reference (faithful port of CombinedPermInvModel.forward, eval mode)
# ---------------------------------------------------------------------------
def reference_forward(params, x, n_conv, n_fc):
    hp = jax.lax.Precision.HIGHEST

    def mini(v, w1, b1, w2, b2):
        v = jnp.maximum(jnp.dot(v, w1, precision=hp) + b1, 0.0)
        v = jnp.maximum(jnp.dot(v, w2, precision=hp) + b2, 0.0)
        return v

    def run_chain(xs, layer_params, is_conv):
        reps, for_prev = [], None
        for p, (w1, b1, w2, b2) in zip(xs, layer_params):
            if is_conv:
                Bp, cin1, cout, k = p.shape
                pm = jnp.transpose(p, (0, 2, 1, 3)).reshape(Bp, cout, cin1 * k)
            else:
                pm = p
            Bp, C, _ = pm.shape
            if for_prev is None:
                pe = pm
            else:
                pe = jnp.concatenate(
                    [pm, jnp.broadcast_to(for_prev, (Bp, C, for_prev.shape[-1]))],
                    axis=-1)
            pp = mini(pe.reshape(Bp * C, -1), w1, b1, w2, b2).reshape(Bp, C, -1)
            reps.append(jnp.sum(pp, axis=1))
            for_prev = pp.reshape(Bp, 1, -1)
        return jnp.concatenate(reps, axis=-1)

    conv_lat = run_chain(x[:n_conv], params["conv_layers"], True)
    fc_lat = run_chain(x[len(x) - n_fc:], params["fc_layers"], False)
    latent = jnp.concatenate([fc_lat, conv_lat], axis=-1)
    rho_w, rho_b = params["rho"]
    return jnp.dot(latent, rho_w, precision=hp) + rho_b


# ---------------------------------------------------------------------------
# Deterministic parameter init (PyTorch Linear-style uniform)
# ---------------------------------------------------------------------------
def _init_linear(key, fan_in, fan_out):
    kw, kb = jax.random.split(key)
    bound = 1.0 / float(fan_in) ** 0.5
    w = jax.random.uniform(kw, (fan_in, fan_out), jnp.float32, -bound, bound)
    b = jax.random.uniform(kb, (fan_out,), jnp.float32, -bound, bound)
    return w, b


def init_combined(key, dims, dim_channels, dim_kernels,
                  inside_dims=INSIDE_DIMS, n_classes=2):
    if n_classes == 2:
        n_classes = 1
    n_layers = len(dims) + len(dim_channels)
    keys = jax.random.split(key, 2 * n_layers + 1)
    ki = 0
    params = {"conv_layers": [], "fc_layers": []}

    prev = 0
    for i, dim in enumerate(dim_channels):
        if i > 0:
            prev = inside_dims[-1] * dim
        fan_in = prev + (1 + dim) * dim_kernels[i]
        w1, b1 = _init_linear(keys[ki], fan_in, inside_dims[0]); ki += 1
        w2, b2 = _init_linear(keys[ki], inside_dims[0], inside_dims[1]); ki += 1
        params["conv_layers"].append((w1, b1, w2, b2))

    prev = 0
    for i, dim in enumerate(dims):
        if i > 0:
            prev = inside_dims[-1] * dim
        fan_in = prev + 1 + dim
        w1, b1 = _init_linear(keys[ki], fan_in, inside_dims[0]); ki += 1
        w2, b2 = _init_linear(keys[ki], inside_dims[0], inside_dims[1]); ki += 1
        params["fc_layers"].append((w1, b1, w2, b2))

    params["rho"] = _init_linear(keys[ki], inside_dims[-1] * n_layers, n_classes)
    return params


# ---------------------------------------------------------------------------
# Main
# ---------------------------------------------------------------------------
if __name__ == "__main__":
    B = 2
    dim_channels = [3, 4]     # conv "channel" dims
    dim_kernels = [9, 9]      # 3x3 kernels flattened
    dims = [6, 5]             # fc dims
    n_conv, n_fc = len(dim_channels), len(dims)

    key = jax.random.PRNGKey(0)
    k_param, k0, k1, k2, k3 = jax.random.split(key, 5)
    params = init_combined(k_param, dims, dim_channels, dim_kernels)

    # Conv-layer "parameter" inputs: (B, c_in+1, c_out, k)
    conv0 = jax.random.normal(
        k0, (B, dim_channels[0] + 1, dim_channels[1], dim_kernels[0]), jnp.float32)
    conv1 = jax.random.normal(
        k1, (B, dim_channels[1] + 1, 6, dim_kernels[1]), jnp.float32)
    # FC-layer "parameter" inputs: (B, n_rows, dims[i]+1) with n_rows_0 == dims[1]
    fc0 = jax.random.normal(k2, (B, dims[1], dims[0] + 1), jnp.float32)
    fc1 = jax.random.normal(k3, (B, 3, dims[1] + 1), jnp.float32)
    x = [conv0, conv1, fc0, fc1]

    # Pack weights once (outside jit); only the x-slab packing is per-call.
    w_slab, meta = pack_model(params, x, n_conv, n_fc)
    fwd = jax.jit(make_forward(meta))

    logits = fwd(w_slab, x)
    jax.block_until_ready(logits)
    assert logits.shape == (B, 1), logits.shape

    ref = reference_forward(params, x, n_conv, n_fc)
    err = float(jnp.max(jnp.abs(logits - ref)))
    assert err < 5e-3, f"max |kernel - reference| = {err}"
    print("KERNEL_OK")
</pallas_src>

<mosaic_0001>
module attributes {stable_mosaic.version = 11 : i64} {
  func.func @kernel(%arg0: memref<48x128xf32, #tpu.memory_space<vmem>>, %arg1: memref<536x128xf32, #tpu.memory_space<vmem>>, %arg2: memref<2x1xf32, #tpu.memory_space<vmem>>, %arg3: memref<2x32xf32, #tpu.memory_space<vmem>>) attributes {dimension_semantics = [], scalar_prefetch = 0 : i64, scratch_operands = 1 : i64, tpu.core_type = #tpu.core_type<tc>} {
    %c0 = arith.constant 0 : index
    %c0_0 = arith.constant 0 : index
    %0 = vector.load %arg0[%c0, %c0_0] : memref<48x128xf32, #tpu.memory_space<vmem>>, vector<8x36xf32>
    %c0_1 = arith.constant 0 : index
    %c0_2 = arith.constant 0 : index
    %1 = vector.load %arg1[%c0_1, %c0_2] : memref<536x128xf32, #tpu.memory_space<vmem>>, vector<36x64xf32>
    %c40 = arith.constant 40 : index
    %c0_3 = arith.constant 0 : index
    %2 = vector.load %arg1[%c40, %c0_3] : memref<536x128xf32, #tpu.memory_space<vmem>>, vector<1x64xf32>
    %cst = arith.constant dense<0.000000e+00> : vector<8x64xf32>
    %3 = tpu.matmul %0, %1, %cst {dimension_numbers = #tpu.dot_dimension_numbers<[1], [0], [0], [1], [0, 0, 1, 1], [], []>} : vector<8x36xf32>, vector<36x64xf32>, vector<8x64xf32> -> vector<8x64xf32>
    %4 = vector.broadcast %2 : vector<1x64xf32> to vector<8x64xf32>
    %5 = arith.addf %3, %4 : vector<8x64xf32>
    %cst_4 = arith.constant 0.000000e+00 : f32
    %6 = vector.broadcast %cst_4 : f32 to vector<8x64xf32>
    %7 = arith.maximumf %5, %6 : vector<8x64xf32>
    %c48 = arith.constant 48 : index
    %c0_5 = arith.constant 0 : index
    %8 = vector.load %arg1[%c48, %c0_5] : memref<536x128xf32, #tpu.memory_space<vmem>>, vector<64x8xf32>
    %c112 = arith.constant 112 : index
    %c0_6 = arith.constant 0 : index
    %9 = vector.load %arg1[%c112, %c0_6] : memref<536x128xf32, #tpu.memory_space<vmem>>, vector<1x8xf32>
    %cst_7 = arith.constant dense<0.000000e+00> : vector<8x8xf32>
    %10 = tpu.matmul %7, %8, %cst_7 {dimension_numbers = #tpu.dot_dimension_numbers<[1], [0], [0], [1], [0, 0, 1, 1], [], []>} : vector<8x64xf32>, vector<64x8xf32>, vector<8x8xf32> -> vector<8x8xf32>
    %11 = vector.broadcast %9 : vector<1x8xf32> to vector<8x8xf32>
    %12 = arith.addf %10, %11 : vector<8x8xf32>
    %cst_8 = arith.constant 0.000000e+00 : f32
    %13 = vector.broadcast %cst_8 : f32 to vector<8x8xf32>
    %14 = arith.maximumf %12, %13 : vector<8x8xf32>
    %15 = vector.extract_strided_slice %14 {offsets = [0, 0], sizes = [4, 8], strides = [1, 1]} : vector<8x8xf32> to vector<4x8xf32>
    %cst_9 = arith.constant dense<0.000000e+00> : vector<8xf32>
    %16 = vector.multi_reduction <add>, %15, %cst_9 [0] : vector<4x8xf32> to vector<8xf32>
    %17 = vector.shape_cast %16 : vector<8xf32> to vector<1x8xf32>
    %18 = vector.extract_strided_slice %15 {offsets = [0, 0], sizes = [1, 8], strides = [1, 1]} : vector<4x8xf32> to vector<1x8xf32>
    %19 = vector.extract_strided_slice %15 {offsets = [1, 0], sizes = [1, 8], strides = [1, 1]} : vector<4x8xf32> to vector<1x8xf32>
    %20 = vector.extract_strided_slice %15 {offsets = [2, 0], sizes = [1, 8], strides = [1, 1]} : vector<4x8xf32> to vector<1x8xf32>
    %21 = vector.extract_strided_slice %15 {offsets = [3, 0], sizes = [1, 8], strides = [1, 1]} : vector<4x8xf32> to vector<1x8xf32>
    %22 = tpu.concatenate %18, %19, %20, %21 in 1 : vector<1x8xf32>, vector<1x8xf32>, vector<1x8xf32>, vector<1x8xf32> -> vector<1x32xf32>
    %23 = vector.extract_strided_slice %14 {offsets = [4, 0], sizes = [4, 8], strides = [1, 1]} : vector<8x8xf32> to vector<4x8xf32>
    %cst_10 = arith.constant dense<0.000000e+00> : vector<8xf32>
    %24 = vector.multi_reduction <add>, %23, %cst_10 [0] : vector<4x8xf32> to vector<8xf32>
    %25 = vector.shape_cast %24 : vector<8xf32> to vector<1x8xf32>
    %26 = vector.extract_strided_slice %23 {offsets = [0, 0], sizes = [1, 8], strides = [1, 1]} : vector<4x8xf32> to vector<1x8xf32>
    %27 = vector.extract_strided_slice %23 {offsets = [1, 0], sizes = [1, 8], strides = [1, 1]} : vector<4x8xf32> to vector<1x8xf32>
    %28 = vector.extract_strided_slice %23 {offsets = [2, 0], sizes = [1, 8], strides = [1, 1]} : vector<4x8xf32> to vector<1x8xf32>
    %29 = vector.extract_strided_slice %23 {offsets = [3, 0], sizes = [1, 8], strides = [1, 1]} : vector<4x8xf32> to vector<1x8xf32>
    %30 = tpu.concatenate %26, %27, %28, %29 in 1 : vector<1x8xf32>, vector<1x8xf32>, vector<1x8xf32>, vector<1x8xf32> -> vector<1x32xf32>
    %31 = tpu.concatenate %17, %25 in 0 : vector<1x8xf32>, vector<1x8xf32> -> vector<2x8xf32>
    %c0_11 = arith.constant 0 : index
    %c16 = arith.constant 16 : index
    %32 = vector.load %arg3[%c0_11, %c16] : memref<2x32xf32, #tpu.memory_space<vmem>>, vector<2x8xf32>
    tpu.vector_store %arg3[%c0_11, %c16], %31 {strides = array<i32>} : memref<2x32xf32, #tpu.memory_space<vmem>>, vector<2x8xf32>,
    %33 = tpu.concatenate %22, %30 in 0 : vector<1x32xf32>, vector<1x32xf32> -> vector<2x32xf32>
    %c8 = arith.constant 8 : index
    %c0_12 = arith.constant 0 : index
    %34 = vector.load %arg0[%c8, %c0_12] : memref<48x128xf32, #tpu.memory_space<vmem>>, vector<12x45xf32>
    %c120 = arith.constant 120 : index
    %c0_13 = arith.constant 0 : index
    %35 = vector.load %arg1[%c120, %c0_13] : memref<536x128xf32, #tpu.memory_space<vmem>>, vector<45x64xf32>
    %c200 = arith.constant 200 : index
    %c0_14 = arith.constant 0 : index
    %36 = vector.load %arg1[%c200, %c0_14] : memref<536x128xf32, #tpu.memory_space<vmem>>, vector<1x64xf32>
    %cst_15 = arith.constant dense<0.000000e+00> : vector<12x64xf32>
    %37 = tpu.matmul %34, %35, %cst_15 {dimension_numbers = #tpu.dot_dimension_numbers<[1], [0], [0], [1], [0, 0, 1, 1], [], []>} : vector<12x45xf32>, vector<45x64xf32>, vector<12x64xf32> -> vector<12x64xf32>
    %38 = vector.broadcast %36 : vector<1x64xf32> to vector<12x64xf32>
    %39 = arith.addf %37, %38 : vector<12x64xf32>
    %c168 = arith.constant 168 : index
    %c0_16 = arith.constant 0 : index
    %40 = vector.load %arg1[%c168, %c0_16] : memref<536x128xf32, #tpu.memory_space<vmem>>, vector<32x64xf32>
    %cst_17 = arith.constant dense<0.000000e+00> : vector<2x64xf32>
    %41 = tpu.matmul %33, %40, %cst_17 {dimension_numbers = #tpu.dot_dimension_numbers<[1], [0], [0], [1], [0, 0, 1, 1], [], []>} : vector<2x32xf32>, vector<32x64xf32>, vector<2x64xf32> -> vector<2x64xf32>
    %42 = vector.extract_strided_slice %41 {offsets = [0, 0], sizes = [1, 64], strides = [1, 1]} : vector<2x64xf32> to vector<1x64xf32>
    %43 = vector.shape_cast %42 : vector<1x64xf32> to vector<1x64xf32>
    %44 = vector.broadcast %43 : vector<1x64xf32> to vector<6x64xf32>
    %45 = vector.extract_strided_slice %41 {offsets = [1, 0], sizes = [1, 64], strides = [1, 1]} : vector<2x64xf32> to vector<1x64xf32>
    %46 = vector.shape_cast %45 : vector<1x64xf32> to vector<1x64xf32>
    %47 = vector.broadcast %46 : vector<1x64xf32> to vector<6x64xf32>
    %48 = tpu.concatenate %44, %47 in 0 : vector<6x64xf32>, vector<6x64xf32> -> vector<12x64xf32>
    %49 = arith.addf %39, %48 : vector<12x64xf32>
    %cst_18 = arith.constant 0.000000e+00 : f32
    %50 = vector.broadcast %cst_18 : f32 to vector<12x64xf32>
    %51 = arith.maximumf %49, %50 : vector<12x64xf32>
    %c208 = arith.constant 208 : index
    %c0_19 = arith.constant 0 : index
    %52 = vector.load %arg1[%c208, %c0_19] : memref<536x128xf32, #tpu.memory_space<vmem>>, vector<64x8xf32>
    %c272 = arith.constant 272 : index
    %c0_20 = arith.constant 0 : index
    %53 = vector.load %arg1[%c272, %c0_20] : memref<536x128xf32, #tpu.memory_space<vmem>>, vector<1x8xf32>
    %cst_21 = arith.constant dense<0.000000e+00> : vector<12x8xf32>
    %54 = tpu.matmul %51, %52, %cst_21 {dimension_numbers = #tpu.dot_dimension_numbers<[1], [0], [0], [1], [0, 0, 1, 1], [], []>} : vector<12x64xf32>, vector<64x8xf32>, vector<12x8xf32> -> vector<12x8xf32>
    %55 = vector.broadcast %53 : vector<1x8xf32> to vector<12x8xf32>
    %56 = arith.addf %54, %55 : vector<12x8xf32>
    %cst_22 = arith.constant 0.000000e+00 : f32
    %57 = vector.broadcast %cst_22 : f32 to vector<12x8xf32>
    %58 = arith.maximumf %56, %57 : vector<12x8xf32>
    %59 = vector.extract_strided_slice %58 {offsets = [0, 0], sizes = [6, 8], strides = [1, 1]} : vector<12x8xf32> to vector<6x8xf32>
    %cst_23 = arith.constant dense<0.000000e+00> : vector<8xf32>
    %60 = vector.multi_reduction <add>, %59, %cst_23 [0] : vector<6x8xf32> to vector<8xf32>
    %61 = vector.shape_cast %60 : vector<8xf32> to vector<1x8xf32>
    %62 = vector.extract_strided_slice %58 {offsets = [6, 0], sizes = [6, 8], strides = [1, 1]} : vector<12x8xf32> to vector<6x8xf32>
    %cst_24 = arith.constant dense<0.000000e+00> : vector<8xf32>
    %63 = vector.multi_reduction <add>, %62, %cst_24 [0] : vector<6x8xf32> to vector<8xf32>
    %64 = vector.shape_cast %63 : vector<8xf32> to vector<1x8xf32>
    %65 = tpu.concatenate %61, %64 in 0 : vector<1x8xf32>, vector<1x8xf32> -> vector<2x8xf32>
    %c0_25 = arith.constant 0 : index
    %c24 = arith.constant 24 : index
    %66 = vector.load %arg3[%c0_25, %c24] : memref<2x32xf32, #tpu.memory_space<vmem>>, vector<2x8xf32>
    tpu.vector_store %arg3[%c0_25, %c24], %65 {strides = array<i32>} : memref<2x32xf32, #tpu.memory_space<vmem>>, vector<2x8xf32>,
    %c24_26 = arith.constant 24 : index
    %c0_27 = arith.constant 0 : index
    %67 = vector.load %arg0[%c24_26, %c0_27] : memref<48x128xf32, #tpu.memory_space<vmem>>, vector<10x7xf32>
    %c280 = arith.constant 280 : index
    %c0_28 = arith.constant 0 : index
    %68 = vector.load %arg1[%c280, %c0_28] : memref<536x128xf32, #tpu.memory_space<vmem>>, vector<7x64xf32>
    %c288 = arith.constant 288 : index
    %c0_29 = arith.constant 0 : index
    %69 = vector.load %arg1[%c288, %c0_29] : memref<536x128xf32, #tpu.memory_space<vmem>>, vector<1x64xf32>
    %cst_30 = arith.constant dense<0.000000e+00> : vector<10x64xf32>
    %70 = tpu.matmul %67, %68, %cst_30 {dimension_numbers = #tpu.dot_dimension_numbers<[1], [0], [0], [1], [0, 0, 1, 1], [], []>} : vector<10x7xf32>, vector<7x64xf32>, vector<10x64xf32> -> vector<10x64xf32>
    %71 = vector.broadcast %69 : vector<1x64xf32> to vector<10x64xf32>
    %72 = arith.addf %70, %71 : vector<10x64xf32>
    %cst_31 = arith.constant 0.000000e+00 : f32
    %73 = vector.broadcast %cst_31 : f32 to vector<10x64xf32>
    %74 = arith.maximumf %72, %73 : vector<10x64xf32>
    %c296 = arith.constant 296 : index
    %c0_32 = arith.constant 0 : index
    %75 = vector.load %arg1[%c296, %c0_32] : memref<536x128xf32, #tpu.memory_space<vmem>>, vector<64x8xf32>
    %c360 = arith.constant 360 : index
    %c0_33 = arith.constant 0 : index
    %76 = vector.load %arg1[%c360, %c0_33] : memref<536x128xf32, #tpu.memory_space<vmem>>, vector<1x8xf32>
    %cst_34 = arith.constant dense<0.000000e+00> : vector<10x8xf32>
    %77 = tpu.matmul %74, %75, %cst_34 {dimension_numbers = #tpu.dot_dimension_numbers<[1], [0], [0], [1], [0, 0, 1, 1], [], []>} : vector<10x64xf32>, vector<64x8xf32>, vector<10x8xf32> -> vector<10x8xf32>
    %78 = vector.broadcast %76 : vector<1x8xf32> to vector<10x8xf32>
    %79 = arith.addf %77, %78 : vector<10x8xf32>
    %cst_35 = arith.constant 0.000000e+00 : f32
    %80 = vector.broadcast %cst_35 : f32 to vector<10x8xf32>
    %81 = arith.maximumf %79, %80 : vector<10x8xf32>
    %82 = vector.extract_strided_slice %81 {offsets = [0, 0], sizes = [5, 8], strides = [1, 1]} : vector<10x8xf32> to vector<5x8xf32>
    %cst_36 = arith.constant dense<0.000000e+00> : vector<8xf32>
    %83 = vector.multi_reduction <add>, %82, %cst_36 [0] : vector<5x8xf32> to vector<8xf32>
    %84 = vector.shape_cast %83 : vector<8xf32> to vector<1x8xf32>
    %85 = vector.extract_strided_slice %82 {offsets = [0, 0], sizes = [1, 8], strides = [1, 1]} : vector<5x8xf32> to vector<1x8xf32>
    %86 = vector.extract_strided_slice %82 {offsets = [1, 0], sizes = [1, 8], strides = [1, 1]} : vector<5x8xf32> to vector<1x8xf32>
    %87 = vector.extract_strided_slice %82 {offsets = [2, 0], sizes = [1, 8], strides = [1, 1]} : vector<5x8xf32> to vector<1x8xf32>
    %88 = vector.extract_strided_slice %82 {offsets = [3, 0], sizes = [1, 8], strides = [1, 1]} : vector<5x8xf32> to vector<1x8xf32>
    %89 = vector.extract_strided_slice %82 {offsets = [4, 0], sizes = [1, 8], strides = [1, 1]} : vector<5x8xf32> to vector<1x8xf32>
    %90 = tpu.concatenate %85, %86, %87, %88, %89 in 1 : vector<1x8xf32>, vector<1x8xf32>, vector<1x8xf32>, vector<1x8xf32>, vector<1x8xf32> -> vector<1x40xf32>
    %91 = vector.extract_strided_slice %81 {offsets = [5, 0], sizes = [5, 8], strides = [1, 1]} : vector<10x8xf32> to vector<5x8xf32>
    %cst_37 = arith.constant dense<0.000000e+00> : vector<8xf32>
    %92 = vector.multi_reduction <add>, %91, %cst_37 [0] : vector<5x8xf32> to vector<8xf32>
    %93 = vector.shape_cast %92 : vector<8xf32> to vector<1x8xf32>
    %94 = vector.extract_strided_slice %91 {offsets = [0, 0], sizes = [1, 8], strides = [1, 1]} : vector<5x8xf32> to vector<1x8xf32>
    %95 = vector.extract_strided_slice %91 {offsets = [1, 0], sizes = [1, 8], strides = [1, 1]} : vector<5x8xf32> to vector<1x8xf32>
    %96 = vector.extract_strided_slice %91 {offsets = [2, 0], sizes = [1, 8], strides = [1, 1]} : vector<5x8xf32> to vector<1x8xf32>
    %97 = vector.extract_strided_slice %91 {offsets = [3, 0], sizes = [1, 8], strides = [1, 1]} : vector<5x8xf32> to vector<1x8xf32>
    %98 = vector.extract_strided_slice %91 {offsets = [4, 0], sizes = [1, 8], strides = [1, 1]} : vector<5x8xf32> to vector<1x8xf32>
    %99 = tpu.concatenate %94, %95, %96, %97, %98 in 1 : vector<1x8xf32>, vector<1x8xf32>, vector<1x8xf32>, vector<1x8xf32>, vector<1x8xf32> -> vector<1x40xf32>
    %100 = tpu.concatenate %84, %93 in 0 : vector<1x8xf32>, vector<1x8xf32> -> vector<2x8xf32>
    %c0_38 = arith.constant 0 : index
    %c0_39 = arith.constant 0 : index
    %101 = vector.load %arg3[%c0_38, %c0_39] : memref<2x32xf32, #tpu.memory_space<vmem>>, vector<2x8xf32>
    tpu.vector_store %arg3[%c0_38, %c0_39], %100 {strides = array<i32>} : memref<2x32xf32, #tpu.memory_space<vmem>>, vector<2x8xf32>,
    %102 = tpu.concatenate %90, %99 in 0 : vector<1x40xf32>, vector<1x40xf32> -> vector<2x40xf32>
    %c40_40 = arith.constant 40 : index
    %c0_41 = arith.constant 0 : index
    %103 = vector.load %arg0[%c40_40, %c0_41] : memref<48x128xf32, #tpu.memory_space<vmem>>, vector<6x6xf32>
    %c368 = arith.constant 368 : index
    %c0_42 = arith.constant 0 : index
    %104 = vector.load %arg1[%c368, %c0_42] : memref<536x128xf32, #tpu.memory_space<vmem>>, vector<6x64xf32>
    %c416 = arith.constant 416 : index
    %c0_43 = arith.constant 0 : index
    %105 = vector.load %arg1[%c416, %c0_43] : memref<536x128xf32, #tpu.memory_space<vmem>>, vector<1x64xf32>
    %cst_44 = arith.constant dense<0.000000e+00> : vector<6x64xf32>
    %106 = tpu.matmul %103, %104, %cst_44 {dimension_numbers = #tpu.dot_dimension_numbers<[1], [0], [0], [1], [0, 0, 1, 1], [], []>} : vector<6x6xf32>, vector<6x64xf32>, vector<6x64xf32> -> vector<6x64xf32>
    %107 = vector.broadcast %105 : vector<1x64xf32> to vector<6x64xf32>
    %108 = arith.addf %106, %107 : vector<6x64xf32>
    %c376 = arith.constant 376 : index
    %c0_45 = arith.constant 0 : index
    %109 = vector.load %arg1[%c376, %c0_45] : memref<536x128xf32, #tpu.memory_space<vmem>>, vector<40x64xf32>
    %cst_46 = arith.constant dense<0.000000e+00> : vector<2x64xf32>
    %110 = tpu.matmul %102, %109, %cst_46 {dimension_numbers = #tpu.dot_dimension_numbers<[1], [0], [0], [1], [0, 0, 1, 1], [], []>} : vector<2x40xf32>, vector<40x64xf32>, vector<2x64xf32> -> vector<2x64xf32>
    %111 = vector.extract_strided_slice %110 {offsets = [0, 0], sizes = [1, 64], strides = [1, 1]} : vector<2x64xf32> to vector<1x64xf32>
    %112 = vector.shape_cast %111 : vector<1x64xf32> to vector<1x64xf32>
    %113 = vector.broadcast %112 : vector<1x64xf32> to vector<3x64xf32>
    %114 = vector.extract_strided_slice %110 {offsets = [1, 0], sizes = [1, 64], strides = [1, 1]} : vector<2x64xf32> to vector<1x64xf32>
    %115 = vector.shape_cast %114 : vector<1x64xf32> to vector<1x64xf32>
    %116 = vector.broadcast %115 : vector<1x64xf32> to vector<3x64xf32>
    %117 = tpu.concatenate %113, %116 in 0 : vector<3x64xf32>, vector<3x64xf32> -> vector<6x64xf32>
    %118 = arith.addf %108, %117 : vector<6x64xf32>
    %cst_47 = arith.constant 0.000000e+00 : f32
    %119 = vector.broadcast %cst_47 : f32 to vector<6x64xf32>
    %120 = arith.maximumf %118, %119 : vector<6x64xf32>
    %c424 = arith.constant 424 : index
    %c0_48 = arith.constant 0 : index
    %121 = vector.load %arg1[%c424, %c0_48] : memref<536x128xf32, #tpu.memory_space<vmem>>, vector<64x8xf32>
    %c488 = arith.constant 488 : index
    %c0_49 = arith.constant 0 : index
    %122 = vector.load %arg1[%c488, %c0_49] : memref<536x128xf32, #tpu.memory_space<vmem>>, vector<1x8xf32>
    %cst_50 = arith.constant dense<0.000000e+00> : vector<6x8xf32>
    %123 = tpu.matmul %120, %121, %cst_50 {dimension_numbers = #tpu.dot_dimension_numbers<[1], [0], [0], [1], [0, 0, 1, 1], [], []>} : vector<6x64xf32>, vector<64x8xf32>, vector<6x8xf32> -> vector<6x8xf32>
    %124 = vector.broadcast %122 : vector<1x8xf32> to vector<6x8xf32>
    %125 = arith.addf %123, %124 : vector<6x8xf32>
    %cst_51 = arith.constant 0.000000e+00 : f32
    %126 = vector.broadcast %cst_51 : f32 to vector<6x8xf32>
    %127 = arith.maximumf %125, %126 : vector<6x8xf32>
    %128 = vector.extract_strided_slice %127 {offsets = [0, 0], sizes = [3, 8], strides = [1, 1]} : vector<6x8xf32> to vector<3x8xf32>
    %cst_52 = arith.constant dense<0.000000e+00> : vector<8xf32>
    %129 = vector.multi_reduction <add>, %128, %cst_52 [0] : vector<3x8xf32> to vector<8xf32>
    %130 = vector.shape_cast %129 : vector<8xf32> to vector<1x8xf32>
    %131 = vector.extract_strided_slice %127 {offsets = [3, 0], sizes = [3, 8], strides = [1, 1]} : vector<6x8xf32> to vector<3x8xf32>
    %cst_53 = arith.constant dense<0.000000e+00> : vector<8xf32>
    %132 = vector.multi_reduction <add>, %131, %cst_53 [0] : vector<3x8xf32> to vector<8xf32>
    %133 = vector.shape_cast %132 : vector<8xf32> to vector<1x8xf32>
    %134 = tpu.concatenate %130, %133 in 0 : vector<1x8xf32>, vector<1x8xf32> -> vector<2x8xf32>
    %c0_54 = arith.constant 0 : index
    %c8_55 = arith.constant 8 : index
    %135 = vector.load %arg3[%c0_54, %c8_55] : memref<2x32xf32, #tpu.memory_space<vmem>>, vector<2x8xf32>
    tpu.vector_store %arg3[%c0_54, %c8_55], %134 {strides = array<i32>} : memref<2x32xf32, #tpu.memory_space<vmem>>, vector<2x8xf32>,
    %c496 = arith.constant 496 : index
    %c0_56 = arith.constant 0 : index
    %136 = vector.load %arg1[%c496, %c0_56] : memref<536x128xf32, #tpu.memory_space<vmem>>, vector<32x1xf32>
    %c528 = arith.constant 528 : index
    %c0_57 = arith.constant 0 : index
    %137 = vector.load %arg1[%c528, %c0_57] : memref<536x128xf32, #tpu.memory_space<vmem>>, vector<1x1xf32>
    %c0_58 = arith.constant 0 : index
    %c0_59 = arith.constant 0 : index
    %138 = vector.load %arg3[%c0_58, %c0_59] : memref<2x32xf32, #tpu.memory_space<vmem>>, vector<2x32xf32>
    %cst_60 = arith.constant dense<0.000000e+00> : vector<2x1xf32>
    %139 = tpu.matmul %138, %136, %cst_60 {dimension_numbers = #tpu.dot_dimension_numbers<[1], [0], [0], [1], [0, 0, 1, 1], [], []>} : vector<2x32xf32>, vector<32x1xf32>, vector<2x1xf32> -> vector<2x1xf32>
    %140 = vector.broadcast %137 : vector<1x1xf32> to vector<2x1xf32>
    %141 = arith.addf %139, %140 : vector<2x1xf32>
    %c0_61 = arith.constant 0 : index
    %c0_62 = arith.constant 0 : index
    %142 = vector.load %arg2[%c0_61, %c0_62] : memref<2x1xf32, #tpu.memory_space<vmem>>, vector<2x1xf32>
    tpu.vector_store %arg2[%c0_61, %c0_62], %141 {strides = array<i32>} : memref<2x1xf32, #tpu.memory_space<vmem>>, vector<2x1xf32>,
    return
  }
}

</mosaic_0001>

<llo_original>
// kernel: forward.1
$region0: #{forward.1}
  #allocation0 [shape = 'u32[]', space=smem, size = 0x4, offset = 0x4, fixed_abs, tag = 'smem constant byte address 0x4 - core index']
  #allocation1 [shape = 'u32[144,128]{1,0:T(1,128)}', space=vmem, size = 0x12000, scoped, tag = 'internal scratch']
  #allocation2 [shape = 'f32[2,32]{1,0:T(2,128)}', space=vmem, size = 0x400, scoped, tag = 'scratch operand']
  %s0 = inlined_call_operand.vmem [shape: f32[48,128], index: 0, kind: input, shape index: {}]
  %s1 = inlined_call_operand.vmem [shape: f32[536,128], index: 1, kind: input, shape index: {}]
  %s2 = inlined_call_operand.vmem [shape: f32[2,1], index: 2, kind: output, shape index: {}]
  %s3 = sld [smem:[#allocation0]]
  $region18: #{forward.1} parent=0
    _
  %s5 = ssub.s32 1, %s3
  %s6 = scalar_select 0, %s5, %s3
  // Predicated region
  $region2: #{forward.1} parent=0 // pred_check
    _
  $region3: #{forward.1} parent=0 // pred_check_branch
    %8 = sbr.rel (0) target = $region5
  $region4: #{forward.1} parent=0 // pred_region
    _
  $region5: #{forward.1} parent=0 // pred_fallthru
    _
  // Predicated region
  $region6: #{forward.1} parent=0 // pred_check
    _
  $region7: #{forward.1} parent=0 // pred_check_branch
    %10 = sbr.rel (0) target = $region9
  $region8: #{forward.1} parent=0 // pred_region
    _
  $region9: #{forward.1} parent=0 // pred_fallthru
    _
  %v11 = vld [vmem:[%s0] sm:$0xff]
  %v12 = vld [vmem:[%s1] sm:$0xff]
  %v13 = vld [vmem:[%s1 + $0x8] sm:$0xff]
  %v14 = vld [vmem:[%s1 + $0x10] sm:$0xff]
  %v15 = vld [vmem:[%s1 + $0x18] sm:$0xff]
  %v16 = vld [vmem:[%s1 + $0x20] sm:$0xf]
  %v17 = vld [vmem:[%s1 + $0x28] sm:$0x1]
  %v18 = vlaneseq
  %v19 = vshrl.u32 %v18, 7
  %v20 = vsub.s32 0, %v19
  %v21 = vrot.slane %v17, %v20
  %vm22 = vcmask 293888
  %v24 = vsel %vm22, %v11, 0
  %vm26 = vcmask 1043456
  %v28 = vsel %vm26, %v16, 0
  %30 = vmatprep.subr.mxu0 0.0
  %31 = vmatpush1.msra.mxu0 %v12
  %32 = vmatprep.subr.mxu0 0.0
  %33 = vmatpush1.msra.mxu0 %v13
  %34 = vmatprep.subr.mxu0 0.0
  %35 = vmatpush1.msra.mxu0 %v14
  %36 = vmatprep.subr.mxu0 0.0
  %37 = vmatpush1.msra.mxu0 %v15
  %38 = vmatprep.subr.mxu0 0.0
  %39 = vmatpush1.msra.mxu0 %v28
  %40 = vmatprep.subr.mxu0 0.0
  %41 = vmatpush1.msra.mxu0 0.0
  %42 = vmatprep.subr.mxu0 0.0
  %43 = vmatpush1.msra.mxu0 0.0
  %44 = vmatprep.subr.mxu0 0.0
  %45 = vmatpush1.msra.mxu0 0.0
  %46 = vmatprep.subr.mxu0 0.0
  %47 = vmatpush1.msra.mxu0 0.0
  %48 = vmatprep.subr.mxu0 0.0
  %49 = vmatpush1.msra.mxu0 0.0
  %50 = vmatprep.subr.mxu0 0.0
  %51 = vmatpush1.msra.mxu0 0.0
  %52 = vmatprep.subr.mxu0 0.0
  %53 = vmatpush1.msra.mxu0 0.0
  %54 = vmatprep.subr.mxu0 0.0
  %55 = vmatpush1.msra.mxu0 0.0
  %56 = vmatprep.subr.mxu0 0.0
  %57 = vmatpush1.msra.mxu0 0.0
  %58 = vmatprep.subr.mxu0 0.0
  %59 = vmatpush1.msra.mxu0 0.0
  %60 = vmatprep.subr.mxu0 0.0
  %61 = vmatpush1.msra.mxu0 0.0
  %62 = vmatprep.subr.mxu0 0.0
  %63 = vmatpush1.msra.mxu0 0.0
  %64 = vmatprep.subr.mxu0 0.0
  %65 = vmatpush1.msra.mxu0 0.0
  %66 = vmatprep.subr.mxu0 0.0
  %67 = vmatpush1.msra.mxu0 0.0
  %68 = vmatprep.subr.mxu0 0.0
  %69 = vmatpush1.msra.mxu0 0.0
  %70 = vmatprep.subr.mxu0 0.0
  %71 = vmatpush1.msra.mxu0 0.0
  %72 = vmatprep.subr.mxu0 0.0
  %73 = vmatpush1.msra.mxu0 0.0
  %74 = vmatprep.subr.mxu0 0.0
  %75 = vmatpush1.msra.mxu0 0.0
  %76 = vmatprep.subr.mxu0 0.0
  %77 = vmatpush1.msra.mxu0 0.0
  %78 = vmatprep.subr.mxu0 0.0
  %79 = vmatpush1.msra.mxu0 0.0
  %80 = vmatprep.subr.mxu0 0.0
  %81 = vmatpush1.msra.mxu0 0.0
  %82 = vmatprep.subr.mxu0 0.0
  %83 = vmatpush1.msra.mxu0 0.0
  %84 = vmatprep.subr.mxu0 0.0
  %85 = vmatpush1.msra.mxu0 0.0
  %86 = vmatprep.subr.mxu0 0.0
  %87 = vmatpush1.msra.mxu0 0.0
  %88 = vmatprep.subr.mxu0 0.0
  %89 = vmatpush1.msra.mxu0 0.0
  %90 = vmatprep.subr.mxu0 0.0
  %91 = vmatpush1.msra.mxu0 0.0
  %92 = vmatprep.subr.mxu0 0.0
  %93 = vmatpush1.msra.mxu0 0.0
  %94 = vmatprep.mubr.f32.mxu0 0.0
  %95 = vmatmul.mubr.f32.gmra.mrb[0].mxu0 %v24
  %v96 = vpop.f32.mrb[0].mxu0
  %v97 = vadd.f32 %v21, %v96
  %v98 = vpop.f32.mrb[0].mxu0
  %99 = vdwg.mxu0
  %v100 = vmax.f32 %v97, 0.0
  %v101 = vld [vmem:[%s1 + $0x30] sm:$0xff]
  %v102 = vld [vmem:[%s1 + $0x38] sm:$0xff]
  %v103 = vld [vmem:[%s1 + $0x40] sm:$0xff]
  %v104 = vld [vmem:[%s1 + $0x48] sm:$0xff]
  %v105 = vld [vmem:[%s1 + $0x50] sm:$0xff]
  %v106 = vld [vmem:[%s1 + $0x58] sm:$0xff]
  %v107 = vld [vmem:[%s1 + $0x60] sm:$0xff]
  %v108 = vld [vmem:[%s1 + $0x68] sm:$0xff]
  %v109 = vld [vmem:[%s1 + $0x70] sm:$0x1]
  %v110 = vlaneseq
  %v111 = vshrl.u32 %v110, 7
  %v112 = vsub.s32 0, %v111
  %v113 = vrot.slane %v109, %v112
  %vm114 = vcmask 523264
  %v116 = vsel %vm114, %v100, 0
  %118 = vmatprep.subr.mxu0 0.0
  %119 = vmatpush1.msra.mxu0 %v101
  %120 = vmatprep.subr.mxu0 0.0
  %121 = vmatpush1.msra.mxu0 %v102
  %122 = vmatprep.subr.mxu0 0.0
  %123 = vmatpush1.msra.mxu0 %v103
  %124 = vmatprep.subr.mxu0 0.0
  %125 = vmatpush1.msra.mxu0 %v104
  %126 = vmatprep.subr.mxu0 0.0
  %127 = vmatpush1.msra.mxu0 %v105
  %128 = vmatprep.subr.mxu0 0.0
  %129 = vmatpush1.msra.mxu0 %v106
  %130 = vmatprep.subr.mxu0 0.0
  %131 = vmatpush1.msra.mxu0 %v107
  %132 = vmatprep.subr.mxu0 0.0
  %133 = vmatpush1.msra.mxu0 %v108
  %134 = vmatprep.subr.mxu0 0.0
  %135 = vmatpush1.msra.mxu0 0.0
  %136 = vmatprep.subr.mxu0 0.0
  %137 = vmatpush1.msra.mxu0 0.0
  %138 = vmatprep.subr.mxu0 0.0
  %139 = vmatpush1.msra.mxu0 0.0
  %140 = vmatprep.subr.mxu0 0.0
  %141 = vmatpush1.msra.mxu0 0.0
  %142 = vmatprep.subr.mxu0 0.0
  %143 = vmatpush1.msra.mxu0 0.0
  %144 = vmatprep.subr.mxu0 0.0
  %145 = vmatpush1.msra.mxu0 0.0
  %146 = vmatprep.subr.mxu0 0.0
  %147 = vmatpush1.msra.mxu0 0.0
  %148 = vmatprep.subr.mxu0 0.0
  %149 = vmatpush1.msra.mxu0 0.0
  %150 = vmatprep.subr.mxu0 0.0
  %151 = vmatpush1.msra.mxu0 0.0
  %152 = vmatprep.subr.mxu0 0.0
  %153 = vmatpush1.msra.mxu0 0.0
  %154 = vmatprep.subr.mxu0 0.0
  %155 = vmatpush1.msra.mxu0 0.0
  %156 = vmatprep.subr.mxu0 0.0
  %157 = vmatpush1.msra.mxu0 0.0
  %158 = vmatprep.subr.mxu0 0.0
  %159 = vmatpush1.msra.mxu0 0.0
  %160 = vmatprep.subr.mxu0 0.0
  %161 = vmatpush1.msra.mxu0 0.0
  %162 = vmatprep.subr.mxu0 0.0
  %163 = vmatpush1.msra.mxu0 0.0
  %164 = vmatprep.subr.mxu0 0.0
  %165 = vmatpush1.msra.mxu0 0.0
  %166 = vmatprep.subr.mxu0 0.0
  %167 = vmatpush1.msra.mxu0 0.0
  %168 = vmatprep.subr.mxu0 0.0
  %169 = vmatpush1.msra.mxu0 0.0
  %170 = vmatprep.subr.mxu0 0.0
  %171 = vmatpush1.msra.mxu0 0.0
  %172 = vmatprep.subr.mxu0 0.0
  %173 = vmatpush1.msra.mxu0 0.0
  %174 = vmatprep.subr.mxu0 0.0
  %175 = vmatpush1.msra.mxu0 0.0
  %176 = vmatprep.subr.mxu0 0.0
  %177 = vmatpush1.msra.mxu0 0.0
  %178 = vmatprep.subr.mxu0 0.0
  %179 = vmatpush1.msra.mxu0 0.0
  %180 = vmatprep.subr.mxu0 0.0
  %181 = vmatpush1.msra.mxu0 0.0
  %182 = vmatprep.mubr.f32.mxu0 0.0
  %183 = vmatmul.mubr.f32.gmra.mrb[0].mxu0 %v116
  %v184 = vpop.f32.mrb[0].mxu0
  %v185 = vadd.f32 %v113, %v184
  %v186 = vpop.f32.mrb[0].mxu0
  %187 = vdwg.mxu0
  %v188 = vmax.f32 %v185, 0.0
  %vm189 = vcmask 60416
  %v190 = vsel %vm189, %v188, 0.0
  %v191 = vrot.slane %v190, 4
  %v192 = vadd.f32 %v190, %v191
  %v193 = vrot.slane %v192, 2
  %v194 = vadd.f32 %v192, %v193
  %v195 = vrot.slane %v194, 1
  %v196 = vadd.f32 %v194, %v195
  %v198 = vrot.slane %v188, 1
  %199 = vrot.lane.b32.xlu0 %v198, 8
  %v200 = vpop.permute.xlu0 %199
  %v202 = vrot.slane %v188, 2
  %203 = vrot.lane.b32.xlu0 %v202, 16
  %v204 = vpop.permute.xlu0 %203
  %v206 = vrot.slane %v188, 3
  %207 = vrot.lane.b32.xlu0 %v206, 24
  %v208 = vpop.permute.xlu0 %207
  %vm210 = vcmask 64512
  %v211 = vsel %vm210, %v188, %v200
  %vm212 = vcmask 130048
  %v213 = vsel %vm212, %v211, %v204
  %vm214 = vcmask 195584
  %v215 = vsel %vm214, %v213, %v208
  %v216 = vrot.slane %v188, 4
  %v218 = vsel %vm189, %v216, 0.0
  %v219 = vrot.slane %v218, 4
  %v220 = vadd.f32 %v218, %v219
  %v221 = vrot.slane %v220, 2
  %v222 = vadd.f32 %v220, %v221
  %v223 = vrot.slane %v222, 1
  %v224 = vadd.f32 %v222, %v223
  %vm225 = vcmask 1040384
  %v226 = vsel %vm225, %v196, %v224
  %228 = vrot.lane.b32.xlu0 %v226, 16
  %v229 = vpop.permute.xlu0 %228
  %vm231 = vcmask 189568
  %232 = vst.msk [vmem:[#allocation2] sm:$0x3] %vm231, %v229
  %v234 = vrot.slane %v215, 3
  %v236 = vsel %vm225, %v215, %v234
  %v237 = vld [vmem:[%s0 + $0x8] sm:$0xff]
  %v238 = vld [vmem:[%s0 + $0x10] sm:$0xf]
  %v239 = vld [vmem:[%s1 + $0x78] sm:$0xff]
  %v240 = vld [vmem:[%s1 + $0x80] sm:$0xff]
  %v241 = vld [vmem:[%s1 + $0x88] sm:$0xff]
  %v242 = vld [vmem:[%s1 + $0x90] sm:$0xff]
  %v243 = vld [vmem:[%s1 + $0x98] sm:$0xff]
  %v244 = vld [vmem:[%s1 + $0xa0] sm:$0x1f]
  %v245 = vld [vmem:[%s1 + $0xc8] sm:$0x1]
  %v246 = vlaneseq
  %v247 = vshrl.u32 %v246, 7
  %v248 = vsub.s32 0, %v247
  %v249 = vrot.slane %v245, %v248
  %vm250 = vcmask 367616
  %v252 = vsel %vm250, %v237, 0
  %v255 = vsel %vm250, %v238, 0
  %vm257 = vcmask 1044480
  %v259 = vsel %vm257, %v244, 0
  %261 = vmatprep.subr.mxu0 0.0
  %262 = vmatpush1.msra.mxu0 %v239
  %263 = vmatprep.subr.mxu0 0.0
  %264 = vmatpush1.msra.mxu0 %v240
  %265 = vmatprep.subr.mxu0 0.0
  %266 = vmatpush1.msra.mxu0 %v241
  %267 = vmatprep.subr.mxu0 0.0
  %268 = vmatpush1.msra.mxu0 %v242
  %269 = vmatprep.subr.mxu0 0.0
  %270 = vmatpush1.msra.mxu0 %v243
  %271 = vmatprep.subr.mxu0 0.0
  %272 = vmatpush1.msra.mxu0 %v259
  %273 = vmatprep.subr.mxu0 0.0
  %274 = vmatpush1.msra.mxu0 0.0
  %275 = vmatprep.subr.mxu0 0.0
  %276 = vmatpush1.msra.mxu0 0.0
  %277 = vmatprep.subr.mxu0 0.0
  %278 = vmatpush1.msra.mxu0 0.0
  %279 = vmatprep.subr.mxu0 0.0
  %280 = vmatpush1.msra.mxu0 0.0
  %281 = vmatprep.subr.mxu0 0.0
  %282 = vmatpush1.msra.mxu0 0.0
  %283 = vmatprep.subr.mxu0 0.0
  %284 = vmatpush1.msra.mxu0 0.0
  %285 = vmatprep.subr.mxu0 0.0
  %286 = vmatpush1.msra.mxu0 0.0
  %287 = vmatprep.subr.mxu0 0.0
  %288 = vmatpush1.msra.mxu0 0.0
  %289 = vmatprep.subr.mxu0 0.0
  %290 = vmatpush1.msra.mxu0 0.0
  %291 = vmatprep.subr.mxu0 0.0
  %292 = vmatpush1.msra.mxu0 0.0
  %293 = vmatprep.subr.mxu0 0.0
  %294 = vmatpush1.msra.mxu0 0.0
  %295 = vmatprep.subr.mxu0 0.0
  %296 = vmatpush1.msra.mxu0 0.0
  %297 = vmatprep.subr.mxu0 0.0
  %298 = vmatpush1.msra.mxu0 0.0
  %299 = vmatprep.subr.mxu0 0.0
  %300 = vmatpush1.msra.mxu0 0.0
  %301 = vmatprep.subr.mxu0 0.0
  %302 = vmatpush1.msra.mxu0 0.0
  %303 = vmatprep.subr.mxu0 0.0
  %304 = vmatpush1.msra.mxu0 0.0
  %305 = vmatprep.subr.mxu0 0.0
  %306 = vmatpush1.msra.mxu0 0.0
  %307 = vmatprep.subr.mxu0 0.0
  %308 = vmatpush1.msra.mxu0 0.0
  %309 = vmatprep.subr.mxu0 0.0
  %310 = vmatpush1.msra.mxu0 0.0
  %311 = vmatprep.subr.mxu0 0.0
  %312 = vmatpush1.msra.mxu0 0.0
  %313 = vmatprep.subr.mxu0 0.0
  %314 = vmatpush1.msra.mxu0 0.0
  %315 = vmatprep.subr.mxu0 0.0
  %316 = vmatpush1.msra.mxu0 0.0
  %317 = vmatprep.subr.mxu0 0.0
  %318 = vmatpush1.msra.mxu0 0.0
  %319 = vmatprep.subr.mxu0 0.0
  %320 = vmatpush1.msra.mxu0 0.0
  %321 = vmatprep.subr.mxu0 0.0
  %322 = vmatpush1.msra.mxu0 0.0
  %323 = vmatprep.subr.mxu0 0.0
  %324 = vmatpush1.msra.mxu0 0.0
  %325 = vmatprep.mubr.f32.mxu0 0.0
  %326 = vmatmul.mubr.f32.gmra.mrb[0].mxu0 %v252
  %v327 = vpop.f32.mrb[0].mxu0
  %v328 = vadd.f32 %v249, %v327
  %v329 = vpop.f32.mrb[0].mxu0
  %330 = vmatprep.mubr.f32.mxu0 0.0
  %331 = vmatmul.mubr.f32.gmra.mrb[0].mxu0 %v255
  %v332 = vpop.f32.mrb[0].mxu0
  %v333 = vadd.f32 %v249, %v332
  %v334 = vpop.f32.mrb[0].mxu0
  %335 = vdwg.mxu0
  %v336 = vld [vmem:[%s1 + $0xa8] sm:$0xff]
  %v337 = vld [vmem:[%s1 + $0xb0] sm:$0xff]
  %v338 = vld [vmem:[%s1 + $0xb8] sm:$0xff]
  %v339 = vld [vmem:[%s1 + $0xc0] sm:$0xff]
  %vm340 = vcmask 261120
  %v342 = vsel %vm340, %v236, 0
  %344 = vmatprep.subr.mxu0 0.0
  %345 = vmatpush1.msra.mxu0 %v336
  %346 = vmatprep.subr.mxu0 0.0
  %347 = vmatpush1.msra.mxu0 %v337
  %348 = vmatprep.subr.mxu0 0.0
  %349 = vmatpush1.msra.mxu0 %v338
  %350 = vmatprep.subr.mxu0 0.0
  %351 = vmatpush1.msra.mxu0 %v339
  %352 = vmatprep.subr.mxu0 0.0
  %353 = vmatpush1.msra.mxu0 0.0
  %354 = vmatprep.subr.mxu0 0.0
  %355 = vmatpush1.msra.mxu0 0.0
  %356 = vmatprep.subr.mxu0 0.0
  %357 = vmatpush1.msra.mxu0 0.0
  %358 = vmatprep.subr.mxu0 0.0
  %359 = vmatpush1.msra.mxu0 0.0
  %360 = vmatprep.subr.mxu0 0.0
  %361 = vmatpush1.msra.mxu0 0.0
  %362 = vmatprep.subr.mxu0 0.0
  %363 = vmatpush1.msra.mxu0 0.0
  %364 = vmatprep.subr.mxu0 0.0
  %365 = vmatpush1.msra.mxu0 0.0
  %366 = vmatprep.subr.mxu0 0.0
  %367 = vmatpush1.msra.mxu0 0.0
  %368 = vmatprep.subr.mxu0 0.0
  %369 = vmatpush1.msra.mxu0 0.0
  %370 = vmatprep.subr.mxu0 0.0
  %371 = vmatpush1.msra.mxu0 0.0
  %372 = vmatprep.subr.mxu0 0.0
  %373 = vmatpush1.msra.mxu0 0.0
  %374 = vmatprep.subr.mxu0 0.0
  %375 = vmatpush1.msra.mxu0 0.0
  %376 = vmatprep.subr.mxu0 0.0
  %377 = vmatpush1.msra.mxu0 0.0
  %378 = vmatprep.subr.mxu0 0.0
  %379 = vmatpush1.msra.mxu0 0.0
  %380 = vmatprep.subr.mxu0 0.0
  %381 = vmatpush1.msra.mxu0 0.0
  %382 = vmatprep.subr.mxu0 0.0
  %383 = vmatpush1.msra.mxu0 0.0
  %384 = vmatprep.subr.mxu0 0.0
  %385 = vmatpush1.msra.mxu0 0.0
  %386 = vmatprep.subr.mxu0 0.0
  %387 = vmatpush1.msra.mxu0 0.0
  %388 = vmatprep.subr.mxu0 0.0
  %389 = vmatpush1.msra.mxu0 0.0
  %390 = vmatprep.subr.mxu0 0.0
  %391 = vmatpush1.msra.mxu0 0.0
  %392 = vmatprep.subr.mxu0 0.0
  %393 = vmatpush1.msra.mxu0 0.0
  %394 = vmatprep.subr.mxu0 0.0
  %395 = vmatpush1.msra.mxu0 0.0
  %396 = vmatprep.subr.mxu0 0.0
  %397 = vmatpush1.msra.mxu0 0.0
  %398 = vmatprep.subr.mxu0 0.0
  %399 = vmatpush1.msra.mxu0 0.0
  %400 = vmatprep.subr.mxu0 0.0
  %401 = vmatpush1.msra.mxu0 0.0
  %402 = vmatprep.subr.mxu0 0.0
  %403 = vmatpush1.msra.mxu0 0.0
  %404 = vmatprep.subr.mxu0 0.0
  %405 = vmatpush1.msra.mxu0 0.0
  %406 = vmatprep.subr.mxu0 0.0
  %407 = vmatpush1.msra.mxu0 0.0
  %408 = vmatprep.mubr.f32.mxu0 0.0
  %409 = vmatmul.mubr.f32.gmra.mrb[0].mxu0 %v342
  %v410 = vpop.f32.mrb[0].mxu0
  %v411 = vadd.f32 0.0, %v410
  %v412 = vpop.f32.mrb[0].mxu0
  %413 = vdwg.mxu0
  %v414 = vlaneseq
  %v415 = vshrl.u32 %v414, 7
  %v416 = vsub.s32 0, %v415
  %v417 = vrot.slane %v411, %v416
  %v418 = vlaneseq
  %v419 = vshrl.u32 %v418, 7
  %v420 = vsub.s32 1, %v419
  %v421 = vrot.slane %v411, %v420
  %vm422 = vcmask 1045504
  %v423 = vsel %vm422, %v417, %v421
  %v424 = vadd.f32 %v328, %v423
  %v425 = vadd.f32 %v333, %v421
  %v426 = vmax.f32 %v424, 0.0
  %v427 = vmax.f32 %v425, 0.0
  %v428 = vld [vmem:[%s1 + $0xd0] sm:$0xff]
  %v429 = vld [vmem:[%s1 + $0xd8] sm:$0xff]
  %v430 = vld [vmem:[%s1 + $0xe0] sm:$0xff]
  %v431 = vld [vmem:[%s1 + $0xe8] sm:$0xff]
  %v432 = vld [vmem:[%s1 + $0xf0] sm:$0xff]
  %v433 = vld [vmem:[%s1 + $0xf8] sm:$0xff]
  %v434 = vld [vmem:[%s1 + $0x100] sm:$0xff]
  %v435 = vld [vmem:[%s1 + $0x108] sm:$0xff]
  %v436 = vld [vmem:[%s1 + $0x110] sm:$0x1]
  %v437 = vlaneseq
  %v438 = vshrl.u32 %v437, 7
  %v439 = vsub.s32 0, %v438
  %v440 = vrot.slane %v436, %v439
  %v442 = vsel %vm114, %v426, 0
  %v445 = vsel %vm114, %v427, 0
  %447 = vmatprep.subr.mxu0 0.0
  %448 = vmatpush1.msra.mxu0 %v428
  %449 = vmatprep.subr.mxu0 0.0
  %450 = vmatpush1.msra.mxu0 %v429
  %451 = vmatprep.subr.mxu0 0.0
  %452 = vmatpush1.msra.mxu0 %v430
  %453 = vmatprep.subr.mxu0 0.0
  %454 = vmatpush1.msra.mxu0 %v431
  %455 = vmatprep.subr.mxu0 0.0
  %456 = vmatpush1.msra.mxu0 %v432
  %457 = vmatprep.subr.mxu0 0.0
  %458 = vmatpush1.msra.mxu0 %v433
  %459 = vmatprep.subr.mxu0 0.0
  %460 = vmatpush1.msra.mxu0 %v434
  %461 = vmatprep.subr.mxu0 0.0
  %462 = vmatpush1.msra.mxu0 %v435
  %463 = vmatprep.subr.mxu0 0.0
  %464 = vmatpush1.msra.mxu0 0.0
  %465 = vmatprep.subr.mxu0 0.0
  %466 = vmatpush1.msra.mxu0 0.0
  %467 = vmatprep.subr.mxu0 0.0
  %468 = vmatpush1.msra.mxu0 0.0
  %469 = vmatprep.subr.mxu0 0.0
  %470 = vmatpush1.msra.mxu0 0.0
  %471 = vmatprep.subr.mxu0 0.0
  %472 = vmatpush1.msra.mxu0 0.0
  %473 = vmatprep.subr.mxu0 0.0
  %474 = vmatpush1.msra.mxu0 0.0
  %475 = vmatprep.subr.mxu0 0.0
  %476 = vmatpush1.msra.mxu0 0.0
  %477 = vmatprep.subr.mxu0 0.0
  %478 = vmatpush1.msra.mxu0 0.0
  %479 = vmatprep.subr.mxu0 0.0
  %480 = vmatpush1.msra.mxu0 0.0
  %481 = vmatprep.subr.mxu0 0.0
  %482 = vmatpush1.msra.mxu0 0.0
  %483 = vmatprep.subr.mxu0 0.0
  %484 = vmatpush1.msra.mxu0 0.0
  %485 = vmatprep.subr.mxu0 0.0
  %486 = vmatpush1.msra.mxu0 0.0
  %487 = vmatprep.subr.mxu0 0.0
  %488 = vmatpush1.msra.mxu0 0.0
  %489 = vmatprep.subr.mxu0 0.0
  %490 = vmatpush1.msra.mxu0 0.0
  %491 = vmatprep.subr.mxu0 0.0
  %492 = vmatpush1.msra.mxu0 0.0
  %493 = vmatprep.subr.mxu0 0.0
  %494 = vmatpush1.msra.mxu0 0.0
  %495 = vmatprep.subr.mxu0 0.0
  %496 = vmatpush1.msra.mxu0 0.0
  %497 = vmatprep.subr.mxu0 0.0
  %498 = vmatpush1.msra.mxu0 0.0
  %499 = vmatprep.subr.mxu0 0.0
  %500 = vmatpush1.msra.mxu0 0.0
  %501 = vmatprep.subr.mxu0 0.0
  %502 = vmatpush1.msra.mxu0 0.0
  %503 = vmatprep.subr.mxu0 0.0
  %504 = vmatpush1.msra.mxu0 0.0
  %505 = vmatprep.subr.mxu0 0.0
  %506 = vmatpush1.msra.mxu0 0.0
  %507 = vmatprep.subr.mxu0 0.0
  %508 = vmatpush1.msra.mxu0 0.0
  %509 = vmatprep.subr.mxu0 0.0
  %510 = vmatpush1.msra.mxu0 0.0
  %511 = vmatprep.mubr.f32.mxu0 0.0
  %512 = vmatmul.mubr.f32.gmra.mrb[0].mxu0 %v442
  %v513 = vpop.f32.mrb[0].mxu0
  %v514 = vadd.f32 %v440, %v513
  %v515 = vpop.f32.mrb[0].mxu0
  %516 = vmatprep.mubr.f32.mxu0 0.0
  %517 = vmatmul.mubr.f32.gmra.mrb[0].mxu0 %v445
  %v518 = vpop.f32.mrb[0].mxu0
  %v519 = vadd.f32 %v440, %v518
  %v520 = vpop.f32.mrb[0].mxu0
  %521 = vdwg.mxu0
  %v522 = vmax.f32 %v514, 0.0
  %v523 = vmax.f32 %v519, 0.0
  %vm524 = vcmask 62464
  %v525 = vsel %vm524, %v522, 0.0
  %v526 = vrot.slane %v525, 4
  %v527 = vadd.f32 %v525, %v526
  %v528 = vrot.slane %v527, 2
  %v529 = vadd.f32 %v527, %v528
  %v530 = vrot.slane %v529, 1
  %v531 = vadd.f32 %v529, %v530
  %vm534 = vcmask 1041408
  %v535 = vrot.slane %v522, 6
  %v536 = vrot.slane %v523, 6
  %v537 = vsel %vm534, %v535, %v536
  %v539 = vsel %vm524, %v537, 0.0
  %v540 = vrot.slane %v539, 4
  %v541 = vadd.f32 %v539, %v540
  %v542 = vrot.slane %v541, 2
  %v543 = vadd.f32 %v541, %v542
  %v544 = vrot.slane %v543, 1
  %v545 = vadd.f32 %v543, %v544
  %v546 = vsel %vm225, %v531, %v545
  %548 = vrot.lane.b32.xlu0 %v546, 24
  %v549 = vpop.permute.xlu0 %548
  %vm551 = vcmask 255168
  %552 = vst.msk [vmem:[#allocation2] sm:$0x3] %vm551, %v549
  %v553 = vld [vmem:[%s0 + $0x18] sm:$0xff]
  %v554 = vld [vmem:[%s0 + $0x20] sm:$0x3]
  %v555 = vld [vmem:[%s1 + $0x118] sm:$0x7f]
  %v556 = vld [vmem:[%s1 + $0x120] sm:$0x1]
  %v557 = vlaneseq
  %v558 = vshrl.u32 %v557, 7
  %v559 = vsub.s32 0, %v558
  %v560 = vrot.slane %v556, %v559
  %vm561 = vcmask 56320
  %v563 = vsel %vm561, %v553, 0
  %v566 = vsel %vm561, %v554, 0
  %vm568 = vcmask 1046528
  %v570 = vsel %vm568, %v555, 0
  %572 = vmatprep.subr.mxu0 0.0
  %573 = vmatpush1.msra.mxu0 %v570
  %574 = vmatprep.subr.mxu0 0.0
  %575 = vmatpush1.msra.mxu0 0.0
  %576 = vmatprep.subr.mxu0 0.0
  %577 = vmatpush1.msra.mxu0 0.0
  %578 = vmatprep.subr.mxu0 0.0
  %579 = vmatpush1.msra.mxu0 0.0
  %580 = vmatprep.subr.mxu0 0.0
  %581 = vmatpush1.msra.mxu0 0.0
  %582 = vmatprep.subr.mxu0 0.0
  %583 = vmatpush1.msra.mxu0 0.0
  %584 = vmatprep.subr.mxu0 0.0
  %585 = vmatpush1.msra.mxu0 0.0
  %586 = vmatprep.subr.mxu0 0.0
  %587 = vmatpush1.msra.mxu0 0.0
  %588 = vmatprep.subr.mxu0 0.0
  %589 = vmatpush1.msra.mxu0 0.0
  %590 = vmatprep.subr.mxu0 0.0
  %591 = vmatpush1.msra.mxu0 0.0
  %592 = vmatprep.subr.mxu0 0.0
  %593 = vmatpush1.msra.mxu0 0.0
  %594 = vmatprep.subr.mxu0 0.0
  %595 = vmatpush1.msra.mxu0 0.0
  %596 = vmatprep.subr.mxu0 0.0
  %597 = vmatpush1.msra.mxu0 0.0
  %598 = vmatprep.subr.mxu0 0.0
  %599 = vmatpush1.msra.mxu0 0.0
  %600 = vmatprep.subr.mxu0 0.0
  %601 = vmatpush1.msra.mxu0 0.0
  %602 = vmatprep.subr.mxu0 0.0
  %603 = vmatpush1.msra.mxu0 0.0
  %604 = vmatprep.subr.mxu0 0.0
  %605 = vmatpush1.msra.mxu0 0.0
  %606 = vmatprep.subr.mxu0 0.0
  %607 = vmatpush1.msra.mxu0 0.0
  %608 = vmatprep.subr.mxu0 0.0
  %609 = vmatpush1.msra.mxu0 0.0
  %610 = vmatprep.subr.mxu0 0.0
  %611 = vmatpush1.msra.mxu0 0.0
  %612 = vmatprep.subr.mxu0 0.0
  %613 = vmatpush1.msra.mxu0 0.0
  %614 = vmatprep.subr.mxu0 0.0
  %615 = vmatpush1.msra.mxu0 0.0
  %616 = vmatprep.subr.mxu0 0.0
  %617 = vmatpush1.msra.mxu0 0.0
  %618 = vmatprep.subr.mxu0 0.0
  %619 = vmatpush1.msra.mxu0 0.0
  %620 = vmatprep.subr.mxu0 0.0
  %621 = vmatpush1.msra.mxu0 0.0
  %622 = vmatprep.subr.mxu0 0.0
  %623 = vmatpush1.msra.mxu0 0.0
  %624 = vmatprep.subr.mxu0 0.0
  %625 = vmatpush1.msra.mxu0 0.0
  %626 = vmatprep.subr.mxu0 0.0
  %627 = vmatpush1.msra.mxu0 0.0
  %628 = vmatprep.subr.mxu0 0.0
  %629 = vmatpush1.msra.mxu0 0.0
  %630 = vmatprep.subr.mxu0 0.0
  %631 = vmatpush1.msra.mxu0 0.0
  %632 = vmatprep.subr.mxu0 0.0
  %633 = vmatpush1.msra.mxu0 0.0
  %634 = vmatprep.subr.mxu0 0.0
  %635 = vmatpush1.msra.mxu0 0.0
  %636 = vmatprep.mubr.f32.mxu0 0.0
  %637 = vmatmul.mubr.f32.gmra.mrb[0].mxu0 %v563
  %v638 = vpop.f32.mrb[0].mxu0
  %v639 = vadd.f32 %v560, %v638
  %v640 = vpop.f32.mrb[0].mxu0
  %641 = vmatprep.mubr.f32.mxu0 0.0
  %642 = vmatmul.mubr.f32.gmra.mrb[0].mxu0 %v566
  %v643 = vpop.f32.mrb[0].mxu0
  %v644 = vadd.f32 %v560, %v643
  %v645 = vpop.f32.mrb[0].mxu0
  %646 = vdwg.mxu0
  %v647 = vmax.f32 %v639, 0.0
  %v648 = vmax.f32 %v644, 0.0
  %v649 = vld [vmem:[%s1 + $0x128] sm:$0xff]
  %v650 = vld [vmem:[%s1 + $0x130] sm:$0xff]
  %v651 = vld [vmem:[%s1 + $0x138] sm:$0xff]
  %v652 = vld [vmem:[%s1 + $0x140] sm:$0xff]
  %v653 = vld [vmem:[%s1 + $0x148] sm:$0xff]
  %v654 = vld [vmem:[%s1 + $0x150] sm:$0xff]
  %v655 = vld [vmem:[%s1 + $0x158] sm:$0xff]
  %v656 = vld [vmem:[%s1 + $0x160] sm:$0xff]
  %v657 = vld [vmem:[%s1 + $0x168] sm:$0x1]
  %v658 = vlaneseq
  %v659 = vshrl.u32 %v658, 7
  %v660 = vsub.s32 0, %v659
  %v661 = vrot.slane %v657, %v660
  %v663 = vsel %vm114, %v647, 0
  %v666 = vsel %vm114, %v648, 0
  %668 = vmatprep.subr.mxu0 0.0
  %669 = vmatpush1.msra.mxu0 %v649
  %670 = vmatprep.subr.mxu0 0.0
  %671 = vmatpush1.msra.mxu0 %v650
  %672 = vmatprep.subr.mxu0 0.0
  %673 = vmatpush1.msra.mxu0 %v651
  %674 = vmatprep.subr.mxu0 0.0
  %675 = vmatpush1.msra.mxu0 %v652
  %676 = vmatprep.subr.mxu0 0.0
  %677 = vmatpush1.msra.mxu0 %v653
  %678 = vmatprep.subr.mxu0 0.0
  %679 = vmatpush1.msra.mxu0 %v654
  %680 = vmatprep.subr.mxu0 0.0
  %681 = vmatpush1.msra.mxu0 %v655
  %682 = vmatprep.subr.mxu0 0.0
  %683 = vmatpush1.msra.mxu0 %v656
  %684 = vmatprep.subr.mxu0 0.0
  %685 = vmatpush1.msra.mxu0 0.0
  %686 = vmatprep.subr.mxu0 0.0
  %687 = vmatpush1.msra.mxu0 0.0
  %688 = vmatprep.subr.mxu0 0.0
  %689 = vmatpush1.msra.mxu0 0.0
  %690 = vmatprep.subr.mxu0 0.0
  %691 = vmatpush1.msra.mxu0 0.0
  %692 = vmatprep.subr.mxu0 0.0
  %693 = vmatpush1.msra.mxu0 0.0
  %694 = vmatprep.subr.mxu0 0.0
  %695 = vmatpush1.msra.mxu0 0.0
  %696 = vmatprep.subr.mxu0 0.0
  %697 = vmatpush1.msra.mxu0 0.0
  %698 = vmatprep.subr.mxu0 0.0
  %699 = vmatpush1.msra.mxu0 0.0
  %700 = vmatprep.subr.mxu0 0.0
  %701 = vmatpush1.msra.mxu0 0.0
  %702 = vmatprep.subr.mxu0 0.0
  %703 = vmatpush1.msra.mxu0 0.0
  %704 = vmatprep.subr.mxu0 0.0
  %705 = vmatpush1.msra.mxu0 0.0
  %706 = vmatprep.subr.mxu0 0.0
  %707 = vmatpush1.msra.mxu0 0.0
  %708 = vmatprep.subr.mxu0 0.0
  %709 = vmatpush1.msra.mxu0 0.0
  %710 = vmatprep.subr.mxu0 0.0
  %711 = vmatpush1.msra.mxu0 0.0
  %712 = vmatprep.subr.mxu0 0.0
  %713 = vmatpush1.msra.mxu0 0.0
  %714 = vmatprep.subr.mxu0 0.0
  %715 = vmatpush1.msra.mxu0 0.0
  %716 = vmatprep.subr.mxu0 0.0
  %717 = vmatpush1.msra.mxu0 0.0
  %718 = vmatprep.subr.mxu0 0.0
  %719 = vmatpush1.msra.mxu0 0.0
  %720 = vmatprep.subr.mxu0 0.0
  %721 = vmatpush1.msra.mxu0 0.0
  %722 = vmatprep.subr.mxu0 0.0
  %723 = vmatpush1.msra.mxu0 0.0
  %724 = vmatprep.subr.mxu0 0.0
  %725 = vmatpush1.msra.mxu0 0.0
  %726 = vmatprep.subr.mxu0 0.0
  %727 = vmatpush1.msra.mxu0 0.0
  %728 = vmatprep.subr.mxu0 0.0
  %729 = vmatpush1.msra.mxu0 0.0
  %730 = vmatprep.subr.mxu0 0.0
  %731 = vmatpush1.msra.mxu0 0.0
  %732 = vmatprep.mubr.f32.mxu0 0.0
  %733 = vmatmul.mubr.f32.gmra.mrb[0].mxu0 %v663
  %v734 = vpop.f32.mrb[0].mxu0
  %v735 = vadd.f32 %v661, %v734
  %v736 = vpop.f32.mrb[0].mxu0
  %737 = vmatprep.mubr.f32.mxu0 0.0
  %738 = vmatmul.mubr.f32.gmra.mrb[0].mxu0 %v666
  %v739 = vpop.f32.mrb[0].mxu0
  %v740 = vadd.f32 %v661, %v739
  %v741 = vpop.f32.mrb[0].mxu0
  %742 = vdwg.mxu0
  %v743 = vmax.f32 %v735, 0.0
  %v744 = vmax.f32 %v740, 0.0
  %vm745 = vcmask 61440
  %v746 = vsel %vm745, %v743, 0.0
  %v747 = vrot.slane %v746, 4
  %v748 = vadd.f32 %v746, %v747
  %v749 = vrot.slane %v748, 2
  %v750 = vadd.f32 %v748, %v749
  %v751 = vrot.slane %v750, 1
  %v752 = vadd.f32 %v750, %v751
  %v754 = vrot.slane %v743, 1
  %755 = vrot.lane.b32.xlu0 %v754, 8
  %v756 = vpop.permute.xlu0 %755
  %v758 = vrot.slane %v743, 2
  %759 = vrot.lane.b32.xlu0 %v758, 16
  %v760 = vpop.permute.xlu0 %759
  %v762 = vrot.slane %v743, 3
  %763 = vrot.lane.b32.xlu0 %v762, 24
  %v764 = vpop.permute.xlu0 %763
  %v766 = vrot.slane %v743, 4
  %767 = vrot.lane.b32.xlu0 %v766, 32
  %v768 = vpop.permute.xlu0 %767
  %v770 = vsel %vm210, %v743, %v756
  %v771 = vsel %vm212, %v770, %v760
  %v772 = vsel %vm214, %v771, %v764
  %v773 = vsel %vm340, %v772, %v768
  %vm775 = vcmask 1042432
  %v776 = vrot.slane %v743, 5
  %v777 = vrot.slane %v744, 5
  %v778 = vsel %vm775, %v776, %v777
  %v780 = vsel %vm745, %v778, 0.0
  %v781 = vrot.slane %v780, 4
  %v782 = vadd.f32 %v780, %v781
  %v783 = vrot.slane %v782, 2
  %v784 = vadd.f32 %v782, %v783
  %v785 = vrot.slane %v784, 1
  %v786 = vadd.f32 %v784, %v785
  %v787 = vrot.slane %v744, 3
  %788 = vrot.lane.b32.xlu0 %v787, 24
  %v789 = vpop.permute.xlu0 %788
  %v791 = vrot.slane %v744, 4
  %792 = vrot.lane.b32.xlu0 %v791, 32
  %v793 = vpop.permute.xlu0 %792
  %v795 = vsel %vm214, %v771, %v789
  %v796 = vsel %vm340, %v795, %v793
  %v797 = vsel %vm225, %v752, %v786
  %vm798 = vcmask 58368
  %799 = vst.msk [vmem:[#allocation2] sm:$0x3] %vm798, %v797
  %v801 = vrot.slane %v796, 4
  %v803 = vsel %vm225, %v773, %v801
  %v804 = vld [vmem:[%s0 + $0x28] sm:$0x3f]
  %v805 = vld [vmem:[%s1 + $0x170] sm:$0x3f]
  %v806 = vld [vmem:[%s1 + $0x1a0] sm:$0x1]
  %v807 = vlaneseq
  %v808 = vshrl.u32 %v807, 7
  %v809 = vsub.s32 0, %v808
  %v810 = vrot.slane %v806, %v809
  %vm811 = vcmask 48128
  %v813 = vsel %vm811, %v804, 0
  %v816 = vsel %vm422, %v805, 0
  %818 = vmatprep.subr.mxu0 0.0
  %819 = vmatpush1.msra.mxu0 %v816
  %820 = vmatprep.subr.mxu0 0.0
  %821 = vmatpush1.msra.mxu0 0.0
  %822 = vmatprep.subr.mxu0 0.0
  %823 = vmatpush1.msra.mxu0 0.0
  %824 = vmatprep.subr.mxu0 0.0
  %825 = vmatpush1.msra.mxu0 0.0
  %826 = vmatprep.subr.mxu0 0.0
  %827 = vmatpush1.msra.mxu0 0.0
  %828 = vmatprep.subr.mxu0 0.0
  %829 = vmatpush1.msra.mxu0 0.0
  %830 = vmatprep.subr.mxu0 0.0
  %831 = vmatpush1.msra.mxu0 0.0
  %832 = vmatprep.subr.mxu0 0.0
  %833 = vmatpush1.msra.mxu0 0.0
  %834 = vmatprep.subr.mxu0 0.0
  %835 = vmatpush1.msra.mxu0 0.0
  %836 = vmatprep.subr.mxu0 0.0
  %837 = vmatpush1.msra.mxu0 0.0
  %838 = vmatprep.subr.mxu0 0.0
  %839 = vmatpush1.msra.mxu0 0.0
  %840 = vmatprep.subr.mxu0 0.0
  %841 = vmatpush1.msra.mxu0 0.0
  %842 = vmatprep.subr.mxu0 0.0
  %843 = vmatpush1.msra.mxu0 0.0
  %844 = vmatprep.subr.mxu0 0.0
  %845 = vmatpush1.msra.mxu0 0.0
  %846 = vmatprep.subr.mxu0 0.0
  %847 = vmatpush1.msra.mxu0 0.0
  %848 = vmatprep.subr.mxu0 0.0
  %849 = vmatpush1.msra.mxu0 0.0
  %850 = vmatprep.subr.mxu0 0.0
  %851 = vmatpush1.msra.mxu0 0.0
  %852 = vmatprep.subr.mxu0 0.0
  %853 = vmatpush1.msra.mxu0 0.0
  %854 = vmatprep.subr.mxu0 0.0
  %855 = vmatpush1.msra.mxu0 0.0
  %856 = vmatprep.subr.mxu0 0.0
  %857 = vmatpush1.msra.mxu0 0.0
  %858 = vmatprep.subr.mxu0 0.0
  %859 = vmatpush1.msra.mxu0 0.0
  %860 = vmatprep.subr.mxu0 0.0
  %861 = vmatpush1.msra.mxu0 0.0
  %862 = vmatprep.subr.mxu0 0.0
  %863 = vmatpush1.msra.mxu0 0.0
  %864 = vmatprep.subr.mxu0 0.0
  %865 = vmatpush1.msra.mxu0 0.0
  %866 = vmatprep.subr.mxu0 0.0
  %867 = vmatpush1.msra.mxu0 0.0
  %868 = vmatprep.subr.mxu0 0.0
  %869 = vmatpush1.msra.mxu0 0.0
  %870 = vmatprep.subr.mxu0 0.0
  %871 = vmatpush1.msra.mxu0 0.0
  %872 = vmatprep.subr.mxu0 0.0
  %873 = vmatpush1.msra.mxu0 0.0
  %874 = vmatprep.subr.mxu0 0.0
  %875 = vmatpush1.msra.mxu0 0.0
  %876 = vmatprep.subr.mxu0 0.0
  %877 = vmatpush1.msra.mxu0 0.0
  %878 = vmatprep.subr.mxu0 0.0
  %879 = vmatpush1.msra.mxu0 0.0
  %880 = vmatprep.subr.mxu0 0.0
  %881 = vmatpush1.msra.mxu0 0.0
  %882 = vmatprep.mubr.f32.mxu0 0.0
  %883 = vmatmul.mubr.f32.gmra.mrb[0].mxu0 %v813
  %v884 = vpop.f32.mrb[0].mxu0
  %v885 = vadd.f32 %v810, %v884
  %v886 = vpop.f32.mrb[0].mxu0
  %887 = vdwg.mxu0
  %v888 = vld [vmem:[%s1 + $0x178] sm:$0xff]
  %v889 = vld [vmem:[%s1 + $0x180] sm:$0xff]
  %v890 = vld [vmem:[%s1 + $0x188] sm:$0xff]
  %v891 = vld [vmem:[%s1 + $0x190] sm:$0xff]
  %v892 = vld [vmem:[%s1 + $0x198] sm:$0xff]
  %vm893 = vcmask 326656
  %v895 = vsel %vm893, %v803, 0
  %897 = vmatprep.subr.mxu0 0.0
  %898 = vmatpush1.msra.mxu0 %v888
  %899 = vmatprep.subr.mxu0 0.0
  %900 = vmatpush1.msra.mxu0 %v889
  %901 = vmatprep.subr.mxu0 0.0
  %902 = vmatpush1.msra.mxu0 %v890
  %903 = vmatprep.subr.mxu0 0.0
  %904 = vmatpush1.msra.mxu0 %v891
  %905 = vmatprep.subr.mxu0 0.0
  %906 = vmatpush1.msra.mxu0 %v892
  %907 = vmatprep.subr.mxu0 0.0
  %908 = vmatpush1.msra.mxu0 0.0
  %909 = vmatprep.subr.mxu0 0.0
  %910 = vmatpush1.msra.mxu0 0.0
  %911 = vmatprep.subr.mxu0 0.0
  %912 = vmatpush1.msra.mxu0 0.0
  %913 = vmatprep.subr.mxu0 0.0
  %914 = vmatpush1.msra.mxu0 0.0
  %915 = vmatprep.subr.mxu0 0.0
  %916 = vmatpush1.msra.mxu0 0.0
  %917 = vmatprep.subr.mxu0 0.0
  %918 = vmatpush1.msra.mxu0 0.0
  %919 = vmatprep.subr.mxu0 0.0
  %920 = vmatpush1.msra.mxu0 0.0
  %921 = vmatprep.subr.mxu0 0.0
  %922 = vmatpush1.msra.mxu0 0.0
  %923 = vmatprep.subr.mxu0 0.0
  %924 = vmatpush1.msra.mxu0 0.0
  %925 = vmatprep.subr.mxu0 0.0
  %926 = vmatpush1.msra.mxu0 0.0
  %927 = vmatprep.subr.mxu0 0.0
  %928 = vmatpush1.msra.mxu0 0.0
  %929 = vmatprep.subr.mxu0 0.0
  %930 = vmatpush1.msra.mxu0 0.0
  %931 = vmatprep.subr.mxu0 0.0
  %932 = vmatpush1.msra.mxu0 0.0
  %933 = vmatprep.subr.mxu0 0.0
  %934 = vmatpush1.msra.mxu0 0.0
  %935 = vmatprep.subr.mxu0 0.0
  %936 = vmatpush1.msra.mxu0 0.0
  %937 = vmatprep.subr.mxu0 0.0
  %938 = vmatpush1.msra.mxu0 0.0
  %939 = vmatprep.subr.mxu0 0.0
  %940 = vmatpush1.msra.mxu0 0.0
  %941 = vmatprep.subr.mxu0 0.0
  %942 = vmatpush1.msra.mxu0 0.0
  %943 = vmatprep.subr.mxu0 0.0
  %944 = vmatpush1.msra.mxu0 0.0
  %945 = vmatprep.subr.mxu0 0.0
  %946 = vmatpush1.msra.mxu0 0.0
  %947 = vmatprep.subr.mxu0 0.0
  %948 = vmatpush1.msra.mxu0 0.0
  %949 = vmatprep.subr.mxu0 0.0
  %950 = vmatpush1.msra.mxu0 0.0
  %951 = vmatprep.subr.mxu0 0.0
  %952 = vmatpush1.msra.mxu0 0.0
  %953 = vmatprep.subr.mxu0 0.0
  %954 = vmatpush1.msra.mxu0 0.0
  %955 = vmatprep.subr.mxu0 0.0
  %956 = vmatpush1.msra.mxu0 0.0
  %957 = vmatprep.subr.mxu0 0.0
  %958 = vmatpush1.msra.mxu0 0.0
  %959 = vmatprep.subr.mxu0 0.0
  %960 = vmatpush1.msra.mxu0 0.0
  %961 = vmatprep.mubr.f32.mxu0 0.0
  %962 = vmatmul.mubr.f32.gmra.mrb[0].mxu0 %v895
  %v963 = vpop.f32.mrb[0].mxu0
  %v964 = vadd.f32 0.0, %v963
  %v965 = vpop.f32.mrb[0].mxu0
  %966 = vdwg.mxu0
  %v967 = vlaneseq
  %v968 = vshrl.u32 %v967, 7
  %v969 = vsub.s32 0, %v968
  %v970 = vrot.slane %v964, %v969
  %v971 = vlaneseq
  %v972 = vshrl.u32 %v971, 7
  %v973 = vsub.s32 1, %v972
  %v974 = vrot.slane %v964, %v973
  %v975 = vsel %vm775, %v970, %v974
  %v976 = vadd.f32 %v885, %v975
  %v977 = vmax.f32 %v976, 0.0
  %v978 = vld [vmem:[%s1 + $0x1a8] sm:$0xff]
  %v979 = vld [vmem:[%s1 + $0x1b0] sm:$0xff]
  %v980 = vld [vmem:[%s1 + $0x1b8] sm:$0xff]
  %v981 = vld [vmem:[%s1 + $0x1c0] sm:$0xff]
  %v982 = vld [vmem:[%s1 + $0x1c8] sm:$0xff]
  %v983 = vld [vmem:[%s1 + $0x1d0] sm:$0xff]
  %v984 = vld [vmem:[%s1 + $0x1d8] sm:$0xff]
  %v985 = vld [vmem:[%s1 + $0x1e0] sm:$0xff]
  %v986 = vld [vmem:[%s1 + $0x1e8] sm:$0x1]
  %v987 = vlaneseq
  %v988 = vshrl.u32 %v987, 7
  %v989 = vsub.s32 0, %v988
  %v990 = vrot.slane %v986, %v989
  %v992 = vsel %vm114, %v977, 0
  %994 = vmatprep.subr.mxu0 0.0
  %995 = vmatpush1.msra.mxu0 %v978
  %996 = vmatprep.subr.mxu0 0.0
  %997 = vmatpush1.msra.mxu0 %v979
  %998 = vmatprep.subr.mxu0 0.0
  %999 = vmatpush1.msra.mxu0 %v980
  %1000 = vmatprep.subr.mxu0 0.0
  %1001 = vmatpush1.msra.mxu0 %v981
  %1002 = vmatprep.subr.mxu0 0.0
  %1003 = vmatpush1.msra.mxu0 %v982
  %1004 = vmatprep.subr.mxu0 0.0
  %1005 = vmatpush1.msra.mxu0 %v983
  %1006 = vmatprep.subr.mxu0 0.0
  %1007 = vmatpush1.msra.mxu0 %v984
  %1008 = vmatprep.subr.mxu0 0.0
  %1009 = vmatpush1.msra.mxu0 %v985
  %1010 = vmatprep.subr.mxu0 0.0
  %1011 = vmatpush1.msra.mxu0 0.0
  %1012 = vmatprep.subr.mxu0 0.0
  %1013 = vmatpush1.msra.mxu0 0.0
  %1014 = vmatprep.subr.mxu0 0.0
  %1015 = vmatpush1.msra.mxu0 0.0
  %1016 = vmatprep.subr.mxu0 0.0
  %1017 = vmatpush1.msra.mxu0 0.0
  %1018 = vmatprep.subr.mxu0 0.0
  %1019 = vmatpush1.msra.mxu0 0.0
  %1020 = vmatprep.subr.mxu0 0.0
  %1021 = vmatpush1.msra.mxu0 0.0
  %1022 = vmatprep.subr.mxu0 0.0
  %1023 = vmatpush1.msra.mxu0 0.0
  %1024 = vmatprep.subr.mxu0 0.0
  %1025 = vmatpush1.msra.mxu0 0.0
  %1026 = vmatprep.subr.mxu0 0.0
  %1027 = vmatpush1.msra.mxu0 0.0
  %1028 = vmatprep.subr.mxu0 0.0
  %1029 = vmatpush1.msra.mxu0 0.0
  %1030 = vmatprep.subr.mxu0 0.0
  %1031 = vmatpush1.msra.mxu0 0.0
  %1032 = vmatprep.subr.mxu0 0.0
  %1033 = vmatpush1.msra.mxu0 0.0
  %1034 = vmatprep.subr.mxu0 0.0
  %1035 = vmatpush1.msra.mxu0 0.0
  %1036 = vmatprep.subr.mxu0 0.0
  %1037 = vmatpush1.msra.mxu0 0.0
  %1038 = vmatprep.subr.mxu0 0.0
  %1039 = vmatpush1.msra.mxu0 0.0
  %1040 = vmatprep.subr.mxu0 0.0
  %1041 = vmatpush1.msra.mxu0 0.0
  %1042 = vmatprep.subr.mxu0 0.0
  %1043 = vmatpush1.msra.mxu0 0.0
  %1044 = vmatprep.subr.mxu0 0.0
  %1045 = vmatpush1.msra.mxu0 0.0
  %1046 = vmatprep.subr.mxu0 0.0
  %1047 = vmatpush1.msra.mxu0 0.0
  %1048 = vmatprep.subr.mxu0 0.0
  %1049 = vmatpush1.msra.mxu0 0.0
  %1050 = vmatprep.subr.mxu0 0.0
  %1051 = vmatpush1.msra.mxu0 0.0
  %1052 = vmatprep.subr.mxu0 0.0
  %1053 = vmatpush1.msra.mxu0 0.0
  %1054 = vmatprep.subr.mxu0 0.0
  %1055 = vmatpush1.msra.mxu0 0.0
  %1056 = vmatprep.subr.mxu0 0.0
  %1057 = vmatpush1.msra.mxu0 0.0
  %1058 = vmatprep.mubr.f32.mxu0 0.0
  %1059 = vmatmul.mubr.f32.gmra.mrb[0].mxu0 %v992
  %v1060 = vpop.f32.mrb[0].mxu0
  %v1061 = vadd.f32 %v990, %v1060
  %v1062 = vpop.f32.mrb[0].mxu0
  %1063 = vdwg.mxu0
  %v1064 = vmax.f32 %v1061, 0.0
  %vm1065 = vcmask 59392
  %v1066 = vsel %vm1065, %v1064, 0.0
  %v1067 = vrot.slane %v1066, 4
  %v1068 = vadd.f32 %v1066, %v1067
  %v1069 = vrot.slane %v1068, 2
  %v1070 = vadd.f32 %v1068, %v1069
  %v1071 = vrot.slane %v1070, 1
  %v1072 = vadd.f32 %v1070, %v1071
  %v1074 = vrot.slane %v1064, 3
  %v1076 = vsel %vm1065, %v1074, 0.0
  %v1077 = vrot.slane %v1076, 4
  %v1078 = vadd.f32 %v1076, %v1077
  %v1079 = vrot.slane %v1078, 2
  %v1080 = vadd.f32 %v1078, %v1079
  %v1081 = vrot.slane %v1080, 1
  %v1082 = vadd.f32 %v1080, %v1081
  %v1083 = vsel %vm225, %v1072, %v1082
  %1085 = vrot.lane.b32.xlu0 %v1083, 8
  %v1086 = vpop.permute.xlu0 %1085
  %vm1088 = vcmask 123968
  %1089 = vst.msk [vmem:[#allocation2] sm:$0x3] %vm1088, %v1086
  %v1090 = vld [vmem:[%s1 + $0x1f0] sm:$0xff]
  %v1091 = vld [vmem:[%s1 + $0x1f8] sm:$0xff]
  %v1092 = vld [vmem:[%s1 + $0x200] sm:$0xff]
  %v1093 = vld [vmem:[%s1 + $0x208] sm:$0xff]
  %v1094 = vld [vmem:[%s1 + $0x210] sm:$0x1]
  %v1095 = vld [vmem:[#allocation2] sm:$0x3]
  %v1096 = vlaneseq
  %v1097 = vshrl.u32 %v1096, 7
  %v1098 = vsub.s32 0, %v1097
  %v1099 = vrot.slane %v1094, %v1098
  %v1101 = vsel %vm340, %v1095, 0
  %1103 = vmatprep.subr.mxu0 0.0
  %1104 = vmatpush1.msra.mxu0 %v1090
  %1105 = vmatprep.subr.mxu0 0.0
  %1106 = vmatpush1.msra.mxu0 %v1091
  %1107 = vmatprep.subr.mxu0 0.0
  %1108 = vmatpush1.msra.mxu0 %v1092
  %1109 = vmatprep.subr.mxu0 0.0
  %1110 = vmatpush1.msra.mxu0 %v1093
  %1111 = vmatprep.subr.mxu0 0.0
  %1112 = vmatpush1.msra.mxu0 0.0
  %1113 = vmatprep.subr.mxu0 0.0
  %1114 = vmatpush1.msra.mxu0 0.0
  %1115 = vmatprep.subr.mxu0 0.0
  %1116 = vmatpush1.msra.mxu0 0.0
  %1117 = vmatprep.subr.mxu0 0.0
  %1118 = vmatpush1.msra.mxu0 0.0
  %1119 = vmatprep.subr.mxu0 0.0
  %1120 = vmatpush1.msra.mxu0 0.0
  %1121 = vmatprep.subr.mxu0 0.0
  %1122 = vmatpush1.msra.mxu0 0.0
  %1123 = vmatprep.subr.mxu0 0.0
  %1124 = vmatpush1.msra.mxu0 0.0
  %1125 = vmatprep.subr.mxu0 0.0
  %1126 = vmatpush1.msra.mxu0 0.0
  %1127 = vmatprep.subr.mxu0 0.0
  %1128 = vmatpush1.msra.mxu0 0.0
  %1129 = vmatprep.subr.mxu0 0.0
  %1130 = vmatpush1.msra.mxu0 0.0
  %1131 = vmatprep.subr.mxu0 0.0
  %1132 = vmatpush1.msra.mxu0 0.0
  %1133 = vmatprep.subr.mxu0 0.0
  %1134 = vmatpush1.msra.mxu0 0.0
  %1135 = vmatprep.subr.mxu0 0.0
  %1136 = vmatpush1.msra.mxu0 0.0
  %1137 = vmatprep.subr.mxu0 0.0
  %1138 = vmatpush1.msra.mxu0 0.0
  %1139 = vmatprep.subr.mxu0 0.0
  %1140 = vmatpush1.msra.mxu0 0.0
  %1141 = vmatprep.subr.mxu0 0.0
  %1142 = vmatpush1.msra.mxu0 0.0
  %1143 = vmatprep.subr.mxu0 0.0
  %1144 = vmatpush1.msra.mxu0 0.0
  %1145 = vmatprep.subr.mxu0 0.0
  %1146 = vmatpush1.msra.mxu0 0.0
  %1147 = vmatprep.subr.mxu0 0.0
  %1148 = vmatpush1.msra.mxu0 0.0
  %1149 = vmatprep.subr.mxu0 0.0
  %1150 = vmatpush1.msra.mxu0 0.0
  %1151 = vmatprep.subr.mxu0 0.0
  %1152 = vmatpush1.msra.mxu0 0.0
  %1153 = vmatprep.subr.mxu0 0.0
  %1154 = vmatpush1.msra.mxu0 0.0
  %1155 = vmatprep.subr.mxu0 0.0
  %1156 = vmatpush1.msra.mxu0 0.0
  %1157 = vmatprep.subr.mxu0 0.0
  %1158 = vmatpush1.msra.mxu0 0.0
  %1159 = vmatprep.subr.mxu0 0.0
  %1160 = vmatpush1.msra.mxu0 0.0
  %1161 = vmatprep.subr.mxu0 0.0
  %1162 = vmatpush1.msra.mxu0 0.0
  %1163 = vmatprep.subr.mxu0 0.0
  %1164 = vmatpush1.msra.mxu0 0.0
  %1165 = vmatprep.subr.mxu0 0.0
  %1166 = vmatpush1.msra.mxu0 0.0
  %1167 = vmatprep.mubr.f32.mxu0 0.0
  %1168 = vmatmul.mubr.f32.gmra.mrb[0].mxu0 %v1101
  %v1169 = vpop.f32.mrb[0].mxu0
  %v1170 = vadd.f32 %v1099, %v1169
  %v1171 = vpop.f32.mrb[0].mxu0
  %1172 = vdwg.mxu0
  %vm1173 = vcmask 1024
  %1174 = vst.msk [vmem:[%s2] sm:$0x3] %vm1173, %v1170
  // Predicated region
  $region10: #{forward.1} parent=0 // pred_check
    _
  $region11: #{forward.1} parent=0 // pred_check_branch
    %1176 = sbr.rel (0) target = $region13
  $region12: #{forward.1} parent=0 // pred_region
    _
  $region13: #{forward.1} parent=0 // pred_fallthru
    _
  // Predicated region
  $region14: #{forward.1} parent=0 // pred_check
    _
  $region15: #{forward.1} parent=0 // pred_check_branch
    %1178 = sbr.rel (0) target = $region17
  $region16: #{forward.1} parent=0 // pred_region
    _
  $region17: #{forward.1} parent=0 // pred_fallthru
    _

</llo_original>
